<compile_context>
chip_gen: v7x
topology: tpu7x:2x2x1
jax: 0.10.0
libtpu: 0.0.40
codegen_flags: <defaults>
</compile_context>

<pallas_src>
import functools

import numpy as np
import jax
import jax.numpy as jnp
from jax.experimental import pallas as pl
from jax.experimental.pallas import tpu as pltpu


# ----------------------------------------------------------------------------
# Parameter setup (deterministic, mirrors init_kernels with invers=True)
# ----------------------------------------------------------------------------
def hamming_periodic(win_len):
    n = np.arange(win_len)
    return 0.54 - 0.46 * np.cos(2.0 * np.pi * n / win_len)


def init_kernels_np(win_len, fft_len, win_type="hamming", invers=True):
    if win_type is None or win_type == "None":
        window = np.ones(win_len)
    else:
        # scipy.signal.get_window('hamming', win_len, fftbins=True) equivalent
        window = hamming_periodic(win_len)
    N = fft_len
    fourier_basis = np.fft.rfft(np.eye(N))[:win_len]          # (win_len, N//2+1) complex
    real_kernel = np.real(fourier_basis)
    imag_kernel = np.imag(fourier_basis)
    kernel = np.concatenate([real_kernel, imag_kernel], 1).T  # (2F, win_len)
    if invers:
        kernel = np.linalg.pinv(kernel).T                     # (2F, win_len)
    kernel = kernel * window                                  # broadcast over win_len
    return kernel.astype(np.float32), window.astype(np.float32)


def _roundup(x, m):
    return ((x + m - 1) // m) * m


# ----------------------------------------------------------------------------
# Pallas kernel
# ----------------------------------------------------------------------------
def istft_kernel(mags_ref, phase_ref, wt_ref, invc_ref, out_ref, *,
                 r_taps, stride_p, halo, tq):
    # mags_ref / phase_ref : [F_p, Tc]           (frames on lanes, Tc = tq + halo)
    # wt_ref               : [R*stride_p, 2*F_p] (pre-transposed, pre-stacked filter)
    # invc_ref             : [stride_p, tq]      (pre-inverted window-energy normalizer)
    # out_ref              : [stride_p, tq]      (polyphase output tile, tq on lanes)
    mags = mags_ref[...]
    ph = phase_ref[...]
    real = mags * jnp.cos(ph)                                   # VPU + EUP, lane-dense
    imag = mags * jnp.sin(ph)

    # K axis = [real | imag] at 8-aligned sublane offsets (F_p multiple of 8).
    cspec = jnp.concatenate([real, imag], axis=0).astype(wt_ref.dtype)  # [2F_p, Tc]

    # One fused MXU GEMM: [win_pad_p, 2F_p] @ [2F_p, Tc] -> [win_pad_p, Tc]
    frames = jnp.dot(wt_ref[...], cspec,
                     preferred_element_type=jnp.float32,
                     precision=jax.lax.Precision.HIGHEST)

    # Overlap-add, register-resident: out[s, j] = sum_r frames[r*stride_p + s, j + halo - r].
    # R static sublane-aligned slabs, each lane-shifted by (halo - r); single dense store.
    acc = frames[0:stride_p, halo:halo + tq]
    for r in range(1, r_taps):
        acc = acc + frames[r * stride_p:(r + 1) * stride_p, (halo - r):(halo - r) + tq]

    out_ref[...] = acc * invc_ref[...]


# ----------------------------------------------------------------------------
# Wrapper
# ----------------------------------------------------------------------------
def conv_istft(mags, phase, weight_np, window_np, *, win_len, stride,
               frame_tile=512, use_bf16_matmul=False):
    B, F, T = mags.shape
    assert weight_np.shape == (2 * F, win_len)

    R = -(-win_len // stride)                 # taps per hop (ceil)
    H = R - 1                                 # frame halo needed by each output tile
    F_p = _roundup(F, 8)
    stride_p = _roundup(stride, 8)
    win_pad_p = R * stride_p

    L = (T - 1) * stride + win_len            # true conv_transpose1d output length
    Lq = T + R - 1                            # polyphase columns covering L
    out_len = T * stride

    Tq = min(_roundup(Lq, 128), _roundup(frame_tile, 128))   # lane-dense, 128-aligned
    NQ = -(-Lq // Tq)
    Lq_pad = NQ * Tq
    Tc = Tq + H

    # ---- host-side constants -------------------------------------------------
    # Fused, transposed, tap-padded filter: Wt[r*stride_p + s, :] holds column
    # j = r*stride + s of the (2F, win_len) filter, real half at cols [0:F],
    # imag half at cols [F_p:F_p+F]; everything else zero.
    w2f = weight_np.astype(np.float32)
    Wt = np.zeros((win_pad_p, 2 * F_p), np.float32)
    for r in range(R):
        n_valid = min(stride, win_len - r * stride)
        for s in range(n_valid):
            j = r * stride + s
            Wt[r * stride_p + s, 0:F] = w2f[0:F, j]
            Wt[r * stride_p + s, F_p:F_p + F] = w2f[F:2 * F, j]
    wt = jnp.asarray(Wt, dtype=jnp.bfloat16 if use_bf16_matmul else jnp.float32)

    # Window-energy normalizer, pre-inverted, zeroed outside the valid range
    # (robust even if padded taps ever become non-zero).
    wsq = window_np.astype(np.float32) ** 2
    coff = np.zeros((L,), np.float32)
    for t in range(T):
        coff[t * stride:t * stride + win_len] += wsq
    inv_n = np.zeros((Lq * stride,), np.float32)
    inv_n[:L] = 1.0 / (coff + 1e-8)
    invc_np = np.zeros((stride_p, Lq_pad), np.float32)
    invc_np[:stride, :Lq] = inv_n.reshape(Lq, stride).T
    invc = jnp.asarray(invc_np)[None]                       # [1, stride_p, Lq_pad]

    # ---- XLA-side input prep: pad F -> F_p, pad frames (front halo + back), chunk ----
    pad_cfg = ((0, 0), (0, F_p - F), (H, Lq_pad - T))
    mags_p = jnp.pad(mags.astype(jnp.float32), pad_cfg)      # [B, F_p, Lq_pad + H]
    phase_p = jnp.pad(phase.astype(jnp.float32), pad_cfg)
    mags_ch = jnp.stack([mags_p[:, :, q * Tq:q * Tq + Tc] for q in range(NQ)], axis=1)
    phase_ch = jnp.stack([phase_p[:, :, q * Tq:q * Tq + Tc] for q in range(NQ)], axis=1)
    # mags_ch / phase_ch: [B, NQ, F_p, Tc]  (R-1 halo frames duplicated host-side)

    kernel = functools.partial(istft_kernel, r_taps=R, stride_p=stride_p, halo=H, tq=Tq)

    out3 = pl.pallas_call(
        kernel,
        out_shape=jax.ShapeDtypeStruct((B, stride_p, Lq_pad), jnp.float32),
        grid=(B, NQ),
        in_specs=[
            pl.BlockSpec((None, None, F_p, Tc), lambda b, q: (b, q, 0, 0)),
            pl.BlockSpec((None, None, F_p, Tc), lambda b, q: (b, q, 0, 0)),
            pl.BlockSpec((win_pad_p, 2 * F_p), lambda b, q: (0, 0)),
            pl.BlockSpec((None, stride_p, Tq), lambda b, q: (0, 0, q)),
        ],
        out_specs=pl.BlockSpec((None, stride_p, Tq), lambda b, q: (b, 0, q)),
        compiler_params=pltpu.CompilerParams(
            dimension_semantics=("parallel", "parallel"),
            vmem_limit_bytes=40 * 1024 * 1024),
    )(mags_ch, phase_ch, wt, invc)

    # Un-polyphase + crop in XLA (layout plumbing, outside the kernel).
    sig = jnp.transpose(out3[:, :stride, :Lq], (0, 2, 1)).reshape(B, Lq * stride)
    start = win_len - stride
    return sig[:, start:start + out_len]


# ----------------------------------------------------------------------------
# Pure-numpy reference (mirrors the PyTorch forward exactly)
# ----------------------------------------------------------------------------
def reference_istft(mags, phase, weight_np, window_np, *, win_len, stride):
    mags = np.asarray(mags, np.float32)
    phase = np.asarray(phase, np.float32)
    B, F, T = mags.shape
    L = (T - 1) * stride + win_len
    real = mags * np.cos(phase)
    imag = mags * np.sin(phase)
    cspec = np.concatenate([real, imag], axis=1)              # [B, 2F, T]
    out_full = np.zeros((B, L), np.float32)
    for b in range(B):
        frames = cspec[b].T @ weight_np                       # [T, win_len]
        for t in range(T):
            out_full[b, t * stride:t * stride + win_len] += frames[t]
    wsq = window_np.astype(np.float32) ** 2
    coff = np.zeros((L,), np.float32)
    for t in range(T):
        coff[t * stride:t * stride + win_len] += wsq
    out = out_full / (coff[None, :] + 1e-8)
    return out[:, win_len - stride:]


# ----------------------------------------------------------------------------
if __name__ == "__main__":
    # Small shapes consistent with the module: fft_len = win_len = 16, hop = 4.
    win_len, win_inc, fft_len = 16, 4, 16
    B = 2
    F = fft_len // 2 + 1          # 9 frequency bins
    T = 8                         # frames

    weight_np, window_np = init_kernels_np(win_len, fft_len, win_type="hamming",
                                           invers=True)   # (2F, win_len), (win_len,)

    key = jax.random.PRNGKey(0)
    k1, k2 = jax.random.split(key)
    mags = jax.random.uniform(k1, (B, F, T), dtype=jnp.float32)          # magnitudes
    phase = jax.random.uniform(k2, (B, F, T), dtype=jnp.float32,
                               minval=-np.pi, maxval=np.pi)              # phase

    out = conv_istft(mags, phase, weight_np, window_np,
                     win_len=win_len, stride=win_inc)
    out = jax.block_until_ready(out)

    ref = reference_istft(np.asarray(mags), np.asarray(phase),
                          weight_np, window_np, win_len=win_len, stride=win_inc)
    np.testing.assert_allclose(np.asarray(out), ref, rtol=5e-3, atol=5e-4)

    print("KERNEL_OK")
</pallas_src>

<mosaic_0001>
module attributes {stable_mosaic.version = 11 : i64} {
  func.func @istft_kernel(%arg0: i32, %arg1: i32, %arg2: memref<1x1x16x131xf32, #tpu.memory_space<vmem>>, %arg3: memref<1x1x16x131xf32, #tpu.memory_space<vmem>>, %arg4: memref<32x32xf32, #tpu.memory_space<vmem>>, %arg5: memref<1x8x128xf32, #tpu.memory_space<vmem>>, %arg6: memref<1x8x128xf32, #tpu.memory_space<vmem>>) attributes {dimension_semantics = [#tpu.dimension_semantics<parallel>, #tpu.dimension_semantics<parallel>], iteration_bounds = array<i64: 2, 1>, scalar_prefetch = 0 : i64, scratch_operands = 0 : i64, tpu.core_type = #tpu.core_type<tc>, window_params = [{transform_indices = @transform_0, window_bounds = array<i64: 1, 1, 16, 131>}, {transform_indices = @transform_1, window_bounds = array<i64: 1, 1, 16, 131>}, {pipeline_mode = #tpu.pipeline_mode<synchronous>, transform_indices = @transform_2, window_bounds = array<i64: 32, 32>}, {transform_indices = @transform_3, window_bounds = array<i64: 1, 8, 128>}, {transform_indices = @transform_4, window_bounds = array<i64: 1, 8, 128>}]} {
    %c0 = arith.constant 0 : index
    %c0_0 = arith.constant 0 : index
    %c0_1 = arith.constant 0 : index
    %c0_2 = arith.constant 0 : index
    %0 = vector.load %arg2[%c0, %c0_0, %c0_1, %c0_2] : memref<1x1x16x131xf32, #tpu.memory_space<vmem>>, vector<1x1x16x131xf32>
    %1 = vector.shape_cast %0 : vector<1x1x16x131xf32> to vector<16x131xf32>
    %c0_3 = arith.constant 0 : index
    %c0_4 = arith.constant 0 : index
    %c0_5 = arith.constant 0 : index
    %c0_6 = arith.constant 0 : index
    %2 = vector.load %arg3[%c0_3, %c0_4, %c0_5, %c0_6] : memref<1x1x16x131xf32, #tpu.memory_space<vmem>>, vector<1x1x16x131xf32>
    %3 = vector.shape_cast %2 : vector<1x1x16x131xf32> to vector<16x131xf32>
    %4 = math.cos %3 : vector<16x131xf32>
    %5 = arith.mulf %1, %4 : vector<16x131xf32>
    %6 = math.sin %3 : vector<16x131xf32>
    %7 = arith.mulf %1, %6 : vector<16x131xf32>
    %8 = tpu.concatenate %5, %7 in 0 : vector<16x131xf32>, vector<16x131xf32> -> vector<32x131xf32>
    %c0_7 = arith.constant 0 : index
    %c0_8 = arith.constant 0 : index
    %9 = vector.load %arg4[%c0_7, %c0_8] : memref<32x32xf32, #tpu.memory_space<vmem>>, vector<32x32xf32>
    %cst = arith.constant dense<0.000000e+00> : vector<32x131xf32>
    %10 = tpu.matmul %9, %8, %cst {dimension_numbers = #tpu.dot_dimension_numbers<[1], [0], [0], [1], [0, 0, 1, 1], [], []>, precision = #tpu.contract_precision<fp32>} : vector<32x32xf32>, vector<32x131xf32>, vector<32x131xf32> -> vector<32x131xf32>
    %11 = vector.extract_strided_slice %10 {offsets = [0, 3], sizes = [8, 128], strides = [1, 1]} : vector<32x131xf32> to vector<8x128xf32>
    %12 = vector.extract_strided_slice %10 {offsets = [8, 2], sizes = [8, 128], strides = [1, 1]} : vector<32x131xf32> to vector<8x128xf32>
    %13 = arith.addf %11, %12 : vector<8x128xf32>
    %14 = vector.extract_strided_slice %10 {offsets = [16, 1], sizes = [8, 128], strides = [1, 1]} : vector<32x131xf32> to vector<8x128xf32>
    %15 = arith.addf %13, %14 : vector<8x128xf32>
    %16 = vector.extract_strided_slice %10 {offsets = [24, 0], sizes = [8, 128], strides = [1, 1]} : vector<32x131xf32> to vector<8x128xf32>
    %17 = arith.addf %15, %16 : vector<8x128xf32>
    %c0_9 = arith.constant 0 : index
    %c0_10 = arith.constant 0 : index
    %c0_11 = arith.constant 0 : index
    %18 = vector.load %arg5[%c0_9, %c0_10, %c0_11] : memref<1x8x128xf32, #tpu.memory_space<vmem>>, vector<1x8x128xf32>
    %19 = vector.shape_cast %18 : vector<1x8x128xf32> to vector<8x128xf32>
    %20 = arith.mulf %17, %19 : vector<8x128xf32>
    %c0_12 = arith.constant 0 : index
    %c0_13 = arith.constant 0 : index
    %c0_14 = arith.constant 0 : index
    %21 = vector.load %arg6[%c0_12, %c0_13, %c0_14] : memref<1x8x128xf32, #tpu.memory_space<vmem>>, vector<1x8x128xf32>
    %22 = vector.shape_cast %21 : vector<1x8x128xf32> to vector<8x128xf32>
    %23 = vector.shape_cast %20 : vector<8x128xf32> to vector<1x8x128xf32>
    tpu.vector_store %arg6[%c0_12, %c0_13, %c0_14], %23 {strides = array<i32>} : memref<1x8x128xf32, #tpu.memory_space<vmem>>, vector<1x8x128xf32>,
    return
  }
  func.func @transform_0(%arg0: i32, %arg1: i32) -> (i32, i32, i32, i32) {
    %c0_i32 = arith.constant 0 : i32
    %c0_i32_0 = arith.constant 0 : i32
    %c0_i32_1 = arith.constant 0 : i32
    return %arg0, %arg1, %c0_i32, %c0_i32_0 : i32, i32, i32, i32
  }
  func.func @transform_1(%arg0: i32, %arg1: i32) -> (i32, i32, i32, i32) {
    %c0_i32 = arith.constant 0 : i32
    %c0_i32_0 = arith.constant 0 : i32
    %c0_i32_1 = arith.constant 0 : i32
    return %arg0, %arg1, %c0_i32, %c0_i32_0 : i32, i32, i32, i32
  }
  func.func @transform_2(%arg0: i32, %arg1: i32) -> (i32, i32) {
    %c0_i32 = arith.constant 0 : i32
    %c0_i32_0 = arith.constant 0 : i32
    %c0_i32_1 = arith.constant 0 : i32
    return %c0_i32, %c0_i32_0 : i32, i32
  }
  func.func @transform_3(%arg0: i32, %arg1: i32) -> (i32, i32, i32) {
    %c0_i32 = arith.constant 0 : i32
    %c0_i32_0 = arith.constant 0 : i32
    %c0_i32_1 = arith.constant 0 : i32
    return %c0_i32, %c0_i32_0, %arg1 : i32, i32, i32
  }
  func.func @transform_4(%arg0: i32, %arg1: i32) -> (i32, i32, i32) {
    %c0_i32 = arith.constant 0 : i32
    %c0_i32_0 = arith.constant 0 : i32
    return %arg0, %c0_i32, %arg1 : i32, i32, i32
  }
}

</mosaic_0001>

<llo_original>
// kernel: tpu_custom_call.1
$region0: #{tpu_custom_call.1}
  #allocation0 [shape = 'u32[]', space=smem, size = 0x4, offset = 0x4, fixed_abs, tag = 'smem constant byte address 0x4 - core index']
  #allocation1 [shape = 'u32[144,128]{1,0:T(1,128)}', space=vmem, size = 0x12000, scoped, tag = 'internal scratch']
  %s0 = inlined_call_operand.hbm [shape: f32[2,1,16,131], index: 0, kind: input, shape index: {}]
  %s1 = inlined_call_operand.hbm [shape: f32[2,1,16,131], index: 1, kind: input, shape index: {}]
  %s2 = inlined_call_operand.hbm [shape: f32[32,32], index: 2, kind: input, shape index: {}]
  %s3 = inlined_call_operand.vmem [shape: f32[1,8,128], index: 3, kind: input, shape index: {}]
  %s4 = inlined_call_operand.hbm [shape: f32[2,8,128], index: 4, kind: output, shape index: {}]
  %s5 = sld [smem:[#allocation0]]
  $region61: #{tpu_custom_call.1} parent=0
    _
  %s7 = ssub.s32 1, %s5
  %s8 = scalar_select 0, %s7, %s5
  $region1: #{tpu_custom_call.1} parent=0
    #allocation2 [shape = 'u8[32768]{0}', space=vmem, size = 0x8000, scoped, tag = 'input window, operand 0']
    #allocation3 [shape = 's32[2]{0}', space=sflag, size = 0x8, scoped, tag = 'scoped memory for tpu_custom_call.1']
    #allocation4 [shape = 's32[2]{0}', space=sflag, size = 0x8, scoped, tag = 'scoped memory for tpu_custom_call.1']
    #allocation5 [shape = 'u8[32768]{0}', space=vmem, size = 0x8000, scoped, tag = 'input window, operand 1']
    #allocation6 [shape = 's32[2]{0}', space=sflag, size = 0x8, scoped, tag = 'scoped memory for tpu_custom_call.1']
    #allocation7 [shape = 'u8[16384]{0}', space=vmem, size = 0x4000, scoped, tag = 'input window, operand 2, single buffered']
    #allocation8 [shape = 'u8[8192]{0}', space=vmem, size = 0x2000, scoped, tag = 'output window, operand 0']
    %9 = vsyncpa [#allocation3], 0
    %s10 = scalar_lea.sflag [#allocation3], 1
    %11 = vsyncpa %s10, 0
    %12 = vsyncpa [#allocation6], 0
    %s13 = scalar_lea.sflag [#allocation6], 1
    %14 = vsyncpa %s13, 0
    %15 = vsyncpa [#allocation4], 0
    %s16 = scalar_lea.sflag [#allocation4], 1
    %17 = vsyncpa %s16, 0
    loop: start=0, step=1, limit=4
    $region2: #{tpu_custom_call.1} parent=1 // loop_pre_header
      _
    $region3: #{tpu_custom_call.1} parent=1 // loop_header
      %s19 = sphi 0, %s23
      %p20 = scmp.ge.s32.totalorder %s19, 4
      %s26 = sphi 0, %s38
      %s27 = sphi 0, %s34
      %s28 = sphi 0, %s26
      %s29 = sphi 0, %s27
      %s30 = sphi 0, %s28
      %s31 = sphi 0, %s29
      %s43 = sphi 0, %s45
      %s46 = sphi 0, %s43
      %s47 = sphi 0, %s46
      %s63 = sphi 0, %s47
      %s71 = sphi 0, %s73
      %s74 = sphi 0, %s71
      %s75 = sphi 0, %s74
      %s91 = sphi 0, %s75
      %s95 = sphi 0, %s95
      %s97 = sphi 0, %s95
      %s98 = sphi 0, %s97
      %s112 = sphi 0, %s98
      %s118 = sphi 0, %s120
      %s121 = sphi 0, %s118
      %s122 = sphi 0, %s121
      %s138 = sphi 0, %s122
      %s146 = sphi 0, %s148
      %s149 = sphi 0, %s146
      %s150 = sphi 0, %s149
      %s166 = sphi 0, %s150
    $region4: #{tpu_custom_call.1} parent=1 // loop_header_branch
      %22 = sbr.rel (%p20) target = $region8
    $region5: #{tpu_custom_call.1} parent=1 // loop_body
      %s24 = ssub.s32 %s19, 1
      %s25 = ssub.s32 %s19, 2
      %s32 = sadd.s32 1, %s27
      %p33 = scmp.ge.s32.totalorder %s32, 1
      %s34 = scalar_select %p33, 0, %s32
      %s35 = sadd.s32 1, %s26
      %s36 = scalar_select %p33, %s35, %s26
      %p37 = scmp.ge.s32.totalorder %s36, 2
      %s38 = scalar_select %p37, 0, %s36
      %s39 = ssub.s32 %s26, %s38
      %s40 = ssub.s32 %s27, %s34
      %s41 = sor.u32 %s39, %s40
      %p42 = scmp.eq.s32.totalorder %s41, 0
      %s44 = sadd.s32 %s43, 1
      %s45 = scalar_select %p42, %s43, %s44
      %p48 = pneg %p42
      %p49 = scmp.eq.s32.totalorder %s19, 1
      %p50 = por %p48, %p49
      %p51 = scmp.ne.s32.totalorder %s43, %s46
      %p52 = scmp.eq.s32.totalorder %s19, 0
      %p53 = por %p51, %p52
      %p54 = scmp.ne.s32.totalorder %s43, %s46
      %p55 = scmp.eq.s32.totalorder %s24, 1
      %p56 = por %p54, %p55
      %p57 = scmp.ne.s32.totalorder %s46, %s47
      %p58 = scmp.eq.s32.totalorder %s24, 0
      %p59 = por %p57, %p58
      %p60 = scmp.ne.s32.totalorder %s46, %s47
      %p61 = scmp.eq.s32.totalorder %s25, 1
      %p62 = por %p60, %p61
      %p64 = scmp.ne.s32.totalorder %s47, %s63
      %p65 = scmp.eq.s32.totalorder %s25, 0
      %p66 = por %p64, %p65
      %s67 = ssub.s32 %s26, %s38
      %s68 = ssub.s32 %s27, %s34
      %s69 = sor.u32 %s67, %s68
      %p70 = scmp.eq.s32.totalorder %s69, 0
      %s72 = sadd.s32 %s71, 1
      %s73 = scalar_select %p70, %s71, %s72
      %p76 = pneg %p70
      %p77 = scmp.eq.s32.totalorder %s19, 1
      %p78 = por %p76, %p77
      %p79 = scmp.ne.s32.totalorder %s71, %s74
      %p80 = scmp.eq.s32.totalorder %s19, 0
      %p81 = por %p79, %p80
      %p82 = scmp.ne.s32.totalorder %s71, %s74
      %p83 = scmp.eq.s32.totalorder %s24, 1
      %p84 = por %p82, %p83
      %p85 = scmp.ne.s32.totalorder %s74, %s75
      %p86 = scmp.eq.s32.totalorder %s24, 0
      %p87 = por %p85, %p86
      %p88 = scmp.ne.s32.totalorder %s74, %s75
      %p89 = scmp.eq.s32.totalorder %s25, 1
      %p90 = por %p88, %p89
      %p92 = scmp.ne.s32.totalorder %s75, %s91
      %p93 = scmp.eq.s32.totalorder %s25, 0
      %p94 = por %p92, %p93
      %s96 = sadd.s32 %s95, 1
      %p99 = scmp.eq.s32.totalorder %s19, 1
      %p100 = scmp.ne.s32.totalorder %s95, %s97
      %p101 = scmp.eq.s32.totalorder %s19, 0
      %p102 = por %p100, %p101
      %p103 = scmp.ne.s32.totalorder %s95, %s97
      %p104 = scmp.eq.s32.totalorder %s24, 1
      %p105 = por %p103, %p104
      %p106 = scmp.ne.s32.totalorder %s97, %s98
      %p107 = scmp.eq.s32.totalorder %s24, 0
      %p108 = por %p106, %p107
      %p109 = scmp.ne.s32.totalorder %s97, %s98
      %p110 = scmp.eq.s32.totalorder %s25, 1
      %p111 = por %p109, %p110
      %p113 = scmp.ne.s32.totalorder %s98, %s112
      %p114 = scmp.eq.s32.totalorder %s25, 0
      %p115 = por %p113, %p114
      %s116 = ssub.s32 %s27, %s34
      %p117 = scmp.eq.s32.totalorder %s116, 0
      %s119 = sadd.s32 %s118, 1
      %s120 = scalar_select %p117, %s118, %s119
      %p123 = pneg %p117
      %p124 = scmp.eq.s32.totalorder %s19, 1
      %p125 = por %p123, %p124
      %p126 = scmp.ne.s32.totalorder %s118, %s121
      %p127 = scmp.eq.s32.totalorder %s19, 0
      %p128 = por %p126, %p127
      %p129 = scmp.ne.s32.totalorder %s118, %s121
      %p130 = scmp.eq.s32.totalorder %s24, 1
      %p131 = por %p129, %p130
      %p132 = scmp.ne.s32.totalorder %s121, %s122
      %p133 = scmp.eq.s32.totalorder %s24, 0
      %p134 = por %p132, %p133
      %p135 = scmp.ne.s32.totalorder %s121, %s122
      %p136 = scmp.eq.s32.totalorder %s25, 1
      %p137 = por %p135, %p136
      %p139 = scmp.ne.s32.totalorder %s122, %s138
      %p140 = scmp.eq.s32.totalorder %s25, 0
      %p141 = por %p139, %p140
      %s142 = ssub.s32 %s26, %s38
      %s143 = ssub.s32 %s27, %s34
      %s144 = sor.u32 %s142, %s143
      %p145 = scmp.eq.s32.totalorder %s144, 0
      %s147 = sadd.s32 %s146, 1
      %s148 = scalar_select %p145, %s146, %s147
      %p151 = pneg %p145
      %p152 = scmp.eq.s32.totalorder %s19, 1
      %p153 = por %p151, %p152
      %p154 = scmp.ne.s32.totalorder %s146, %s149
      %p155 = scmp.eq.s32.totalorder %s19, 0
      %p156 = por %p154, %p155
      %p157 = scmp.ne.s32.totalorder %s146, %s149
      %p158 = scmp.eq.s32.totalorder %s24, 1
      %p159 = por %p157, %p158
      %p160 = scmp.ne.s32.totalorder %s149, %s150
      %p161 = scmp.eq.s32.totalorder %s24, 0
      %p162 = por %p160, %p161
      %p163 = scmp.ne.s32.totalorder %s149, %s150
      %p164 = scmp.eq.s32.totalorder %s25, 1
      %p165 = por %p163, %p164
      %p167 = scmp.ne.s32.totalorder %s150, %s166
      %p168 = scmp.eq.s32.totalorder %s25, 0
      %p169 = por %p167, %p168
      %p170 = scmp.le.s32.totalorder 1, %s19
      %p171 = scmp.lt.s32.totalorder %s19, 3
      %p172 = pnand %p170, %p171
      %p173 = pneg %p172
      // Predicated region
      $region9: #{tpu_custom_call.1} parent=5 // pred_check
        _
      $region10: #{tpu_custom_call.1} parent=5 // pred_check_branch
        %175 = sbr.rel (%p172) target = $region12
      $region11: #{tpu_custom_call.1} parent=5 // pred_region
        %s176 = ssub.s32 %s19, 1
        // Predicated region
        $region13: #{tpu_custom_call.1} parent=11 // pred_check
          %p177 = pneg %p108
        $region14: #{tpu_custom_call.1} parent=11 // pred_check_branch
          %179 = sbr.rel (%p177) target = $region16
        $region15: #{tpu_custom_call.1} parent=11 // pred_region
          %s181 = ssub.s32 512, 512
          %182 = vsyncadd [#allocation6], %s181
          %s183 = sshll.u32 [#allocation7], 4
          %s184 = int_to_ptr.vmem [resolvable:$true] %s183
          %189 = dma.hbm_to_vmem [thread:$0]  %s2, 512, %s184, [#allocation6], 128, 128, 8
        $region16: #{tpu_custom_call.1} parent=11 // pred_fallthru
          _
        // Predicated region
        $region17: #{tpu_custom_call.1} parent=11 // pred_check
          %p190 = pneg %p134
        $region18: #{tpu_custom_call.1} parent=11 // pred_check_branch
          %192 = sbr.rel (%p190) target = $region20
        $region19: #{tpu_custom_call.1} parent=11 // pred_region
          %p193 = scmp.lt.s32.totalorder %s29, 0
          %s194 = scalar_select %p193, %s29, 0
          %s195 = smul.addr %s194, 8
          %s196 = scalar_lea.vmem %s3, %s195
        $region20: #{tpu_custom_call.1} parent=11 // pred_fallthru
          _
      $region12: #{tpu_custom_call.1} parent=5 // pred_fallthru
        _
      %p197 = scmp.lt.s32.totalorder %s19, 2
      // Predicated region
      $region21: #{tpu_custom_call.1} parent=5 // pred_check
        %p198 = pneg %p197
      $region22: #{tpu_custom_call.1} parent=5 // pred_check_branch
        %200 = sbr.rel (%p198) target = $region24
      $region23: #{tpu_custom_call.1} parent=5 // pred_region
        // Predicated region
        $region25: #{tpu_custom_call.1} parent=23 // pred_check
          %p201 = pneg %p53
        $region26: #{tpu_custom_call.1} parent=23 // pred_check_branch
          %203 = sbr.rel (%p201) target = $region28
        $region27: #{tpu_custom_call.1} parent=23 // pred_region
          %s204 = sand.u32 %s43, 1
          %s205 = scalar_lea.sflag [#allocation3], %s204
          %s206 = sand.u32 %s43, 1
          %s207 = smul.addr %s206, 32
          %s208 = scalar_lea.vmem [#allocation2], %s207
          %s210 = ssub.s32 512, 512
          %211 = vsyncadd %s205, %s210
          %s212 = smul.addr %s27, 4
          %s213 = smul.addr %s26, 4
          %s214 = sadd.s32 %s212, %s213
          %s215 = smul.addr %s214, 128
          %s216 = scalar_lea.hbm %s0, %s215
          %s217 = sshll.u32 %s208, 4
          %s218 = int_to_ptr.vmem [resolvable:$true] %s217
          %223 = dma.hbm_to_vmem [thread:$0]  %s216, 512, %s218, %s205, 256, 256, 16
        $region28: #{tpu_custom_call.1} parent=23 // pred_fallthru
          _
        // Predicated region
        $region29: #{tpu_custom_call.1} parent=23 // pred_check
          %p224 = pneg %p81
        $region30: #{tpu_custom_call.1} parent=23 // pred_check_branch
          %226 = sbr.rel (%p224) target = $region32
        $region31: #{tpu_custom_call.1} parent=23 // pred_region
          %s227 = sand.u32 %s19, 1
          %s228 = scalar_lea.sflag [#allocation6], %s227
          %s229 = sand.u32 %s71, 1
          %s230 = smul.addr %s229, 32
          %s231 = scalar_lea.vmem [#allocation5], %s230
          %s233 = ssub.s32 512, 512
          %234 = vsyncadd %s228, %s233
          %s235 = smul.addr %s27, 4
          %s236 = smul.addr %s26, 4
          %s237 = sadd.s32 %s235, %s236
          %s238 = smul.addr %s237, 128
          %s239 = scalar_lea.hbm %s1, %s238
          %s240 = sshll.u32 %s231, 4
          %s241 = int_to_ptr.vmem [resolvable:$true] %s240
          %246 = dma.hbm_to_vmem [thread:$0]  %s239, 512, %s241, %s228, 256, 256, 16
        $region32: #{tpu_custom_call.1} parent=23 // pred_fallthru
          _
      $region24: #{tpu_custom_call.1} parent=5 // pred_fallthru
        _
      %p247 = scmp.le.s32.totalorder 1, %s19
      %p248 = scmp.lt.s32.totalorder %s19, 3
      %p249 = pnand %p247, %p248
      %p250 = pneg %p249
      // Predicated region
      $region33: #{tpu_custom_call.1} parent=5 // pred_check
        _
      $region34: #{tpu_custom_call.1} parent=5 // pred_check_branch
        %252 = sbr.rel (%p249) target = $region36
      $region35: #{tpu_custom_call.1} parent=5 // pred_region
        %s253 = ssub.s32 %s19, 1
        %s254 = sand.u32 %s46, 1
        %s255 = scalar_lea.sflag [#allocation3], %s254
        %s256 = sand.u32 %s46, 1
        %s257 = smul.addr %s256, 32
        %s258 = scalar_lea.vmem [#allocation2], %s257
        // Predicated region
        $region37: #{tpu_custom_call.1} parent=35 // pred_check
          %p259 = pneg %p59
        $region38: #{tpu_custom_call.1} parent=35 // pred_check_branch
          %261 = sbr.rel (%p259) target = $region40
        $region39: #{tpu_custom_call.1} parent=35 // pred_region
          %262 = dma.done %s255, 512
        $region40: #{tpu_custom_call.1} parent=35 // pred_fallthru
          _
        %s263 = sand.u32 %s24, 1
        %s264 = scalar_lea.sflag [#allocation6], %s263
        %s265 = sand.u32 %s74, 1
        %s266 = smul.addr %s265, 32
        %s267 = scalar_lea.vmem [#allocation5], %s266
        // Predicated region
        $region41: #{tpu_custom_call.1} parent=35 // pred_check
          %p268 = pneg %p87
        $region42: #{tpu_custom_call.1} parent=35 // pred_check_branch
          %270 = sbr.rel (%p268) target = $region44
        $region43: #{tpu_custom_call.1} parent=35 // pred_region
          %271 = dma.done %s264, 512
        $region44: #{tpu_custom_call.1} parent=35 // pred_fallthru
          _
        // Predicated region
        $region45: #{tpu_custom_call.1} parent=35 // pred_check
          %p272 = pneg %p108
        $region46: #{tpu_custom_call.1} parent=35 // pred_check_branch
          %274 = sbr.rel (%p272) target = $region48
        $region47: #{tpu_custom_call.1} parent=35 // pred_region
          %275 = dma.done [#allocation6], 512
        $region48: #{tpu_custom_call.1} parent=35 // pred_fallthru
          _
        %s276 = sand.u32 %s46, 1
        %s277 = scalar_lea.sflag [#allocation3], %s276
        %s278 = sand.u32 %s46, 1
        %s279 = smul.addr %s278, 32
        %s280 = scalar_lea.vmem [#allocation2], %s279
        %p281 = pneg %p59
        %p282 = pneg %p56
        %s283 = sand.u32 %s24, 1
        %s284 = scalar_lea.sflag [#allocation6], %s283
        %s285 = sand.u32 %s74, 1
        %s286 = smul.addr %s285, 32
        %s287 = scalar_lea.vmem [#allocation5], %s286
        %p288 = pneg %p87
        %p289 = pneg %p84
        %p290 = pneg %p108
        %p291 = pneg %p105
        %p292 = scmp.lt.s32.totalorder %s29, 0
        %s293 = scalar_select %p292, %s29, 0
        %s294 = smul.addr %s293, 8
        %s295 = scalar_lea.vmem %s3, %s294
        %p296 = pneg %p134
        %p297 = pneg %p131
        %p298 = pneg %p162
        %p299 = pneg %p159
        %s300 = sand.u32 %s149, 1
        %s301 = scalar_lea.sflag [#allocation4], %s300
        %s302 = sand.u32 %s149, 1
        %s303 = smul.addr %s302, 8
        %s304 = scalar_lea.vmem [#allocation8], %s303
        %p305 = scmp.lt.s32.totalorder %s29, 0
        %s306 = scalar_select %p305, %s29, 0
        %s307 = smul.addr %s306, 8
        %s308 = scalar_lea.vmem %s3, %s307
        %v309 = vld [vmem:[%s258] sm:$0xff]
        %v310 = vld [vmem:[%s258 + $0x8] sm:$0xff]
        %v311 = vld [vmem:[%s258 + $0x10] sm:$0xff]
        %v312 = vld [vmem:[%s258 + $0x18] sm:$0xff]
        %v313 = vld [vmem:[%s267] sm:$0xff]
        %v314 = vld [vmem:[%s267 + $0x8] sm:$0xff]
        %v315 = vld [vmem:[%s267 + $0x10] sm:$0xff]
        %v316 = vld [vmem:[%s267 + $0x18] sm:$0xff]
        %v317 = vand.u32 2147483647, %v313
        %vm318 = vcmp.le.f32.partialorder %v317, 0.7853982
        %vm319 = vcmp.lt.s32.totalorder %v313, 0
        %v320 = vand.u32 %v313, 2139095040
        %v321 = vshrl.u32 %v320, 23
        %v322 = vsub.s32 %v321, 127
        %v323 = vand.u32 2147483647, %v313
        %v324 = vand.u32 %v323, 8388607
        %v325 = vor.u32 %v324, 8388608
        %v326 = vsub.s32 0, %v325
        %v327 = vadd.s32 %v322, 1
        %vm328 = vcmp.gt.s32.totalorder %v327, 0
        %v329 = vsel %vm328, %v327, 0
        %v330 = vshrl.u32 %v329, 5
        %v331 = vand.u32 %v329, 31
        %v332 = vsub.s32 32, %v331
        %v333 = vshrl.u32 683565275, %v332
        %v334 = vshll.u32 683565275, %v331
        %v335 = vshrl.u32 2475754826, %v332
        %v336 = vor.u32 %v334, %v335
        %v337 = vshll.u32 2475754826, %v331
        %v338 = vshrl.u32 2131351028, %v332
        %v339 = vor.u32 %v337, %v338
        %v340 = vshll.u32 2131351028, %v331
        %v341 = vshrl.u32 2102212464, %v332
        %v342 = vor.u32 %v340, %v341
        %v343 = vshll.u32 2102212464, %v331
        %v344 = vshrl.u32 920167782, %v332
        %v345 = vor.u32 %v343, %v344
        %v346 = vshll.u32 920167782, %v331
        %v347 = vshrl.u32 1326507024, %v332
        %v348 = vor.u32 %v346, %v347
        %vm349 = vcmp.lt.s32.totalorder %v330, 1
        %vm350 = vcmp.lt.s32.totalorder %v330, 2
        %vm351 = vcmp.lt.s32.totalorder %v330, 3
        %vm352 = vcmp.lt.s32.totalorder %v330, 4
        %v353 = vsel %vm349, %v333, %v336
        %v354 = vsel %vm352, %v342, 2102212464
        %v355 = vsel %vm351, %v339, %v354
        %v356 = vsel %vm350, %v353, %v355
        %v357 = vsel %vm349, %v336, %v339
        %v358 = vsel %vm352, %v345, 920167782
        %v359 = vsel %vm351, %v342, %v358
        %v360 = vsel %vm350, %v357, %v359
        %v361 = vsel %vm349, %v339, %v342
        %v362 = vsel %vm352, %v348, 1326507024
        %v363 = vsel %vm351, %v345, %v362
        %v364 = vsel %vm350, %v361, %v363
        %v365 = vshll.u32 %v325, 8
        %v366 = vmul.u32.u64.compose %v365, %v364
        %v367 = vextract.low.u32 %v366
        %v368 = vextract.high.u32 %v366
        %v369 = vmul.u32.u64.compose %v365, %v360
        %v370 = vextract.low.u32 %v369
        %v371 = vextract.high.u32 %v369
        %v372 = vmul.u32 %v365, %v356
        %v373 = vadd.s32 %v368, %v370
        %vm374 = vc.u32 %v368, %v370
        %v375 = vadd.s32 %v371, 1
        %v376 = vsel %vm374, %v375, %v371
        %v377 = vadd.s32 %v372, %v376
        %v378 = vadd.s32 %v377, 536870912
        %v379 = vshrl.u32 %v378, 30
        %v380 = vshll.u32 %v379, 30
        %v381 = vsub.s32 %v377, %v380
        %vm382 = vcmp.lt.s32.totalorder %v381, 0
        %v383 = vsub.s32 0, %v381
        %v384 = vsel %vm382, %v383, %v381
        %v385 = vclz %v384
        %v386 = vsub.s32 %v385, 2
        %vm387 = vcmp.gt.s32.totalorder 0, %v386
        %v388 = vsel %vm387, 0, %v386
        %v389 = vsub.s32 32, %v388
        %v390 = vshll.u32 %v381, %v388
        %v391 = vshrl.u32 %v373, %v389
        %v392 = vor.u32 %v390, %v391
        %v393 = vsub.s32 4294967266, %v388
        %v394 = vadd.s32 %v393, 127
        %v395 = vshll.u32 %v394, 23
        %v396 = vor.u32 4788187, %v395
        %v397 = vand.u32 2147483647, %v396
        %v399 = vcvt.s32.f32 %v392
        %v400 = vmul.f32 %v399, %v397
        %v401 = vxor.u32 %v400, 2147483648
        %v402 = vsel %vm319, %v401, %v400
        %v403 = vsub.s32 4, %v379
        %v404 = vsel %vm319, %v403, %v379
        %v405 = vsel %vm318, %v313, %v402
        %v406 = vsel %vm318, 0, %v404
        %v407 = vcosq.f32.pop %v405
        %v408 = vsinq.f32.pop %v405
        %vm409 = vweird.f32 %v313
        %v410 = vand.u32 %v406, 3
        %vm411 = vcmp.lt.s32.totalorder %v410, 2
        %vm412 = vcmp.eq.s32.totalorder %v410, 0
        %v413 = vxor.u32 %v408, 2147483648
        %v414 = vsel %vm412, %v407, %v413
        %vm415 = vcmp.eq.s32.totalorder %v410, 2
        %v416 = vxor.u32 %v407, 2147483648
        %v417 = vsel %vm415, %v416, %v408
        %v418 = vsel %vm411, %v414, %v417
        %v419 = vsel %vm409, nan, %v418
        %v420 = vand.u32 2147483647, %v314
        %vm421 = vcmp.le.f32.partialorder %v420, 0.7853982
        %vm422 = vcmp.lt.s32.totalorder %v314, 0
        %v423 = vand.u32 %v314, 2139095040
        %v424 = vshrl.u32 %v423, 23
        %v425 = vsub.s32 %v424, 127
        %v426 = vand.u32 2147483647, %v314
        %v427 = vand.u32 %v426, 8388607
        %v428 = vor.u32 %v427, 8388608
        %v429 = vsub.s32 0, %v428
        %v430 = vadd.s32 %v425, 1
        %vm431 = vcmp.gt.s32.totalorder %v430, 0
        %v432 = vsel %vm431, %v430, 0
        %v433 = vshrl.u32 %v432, 5
        %v434 = vand.u32 %v432, 31
        %v435 = vsub.s32 32, %v434
        %v436 = vshrl.u32 683565275, %v435
        %v437 = vshll.u32 683565275, %v434
        %v438 = vshrl.u32 2475754826, %v435
        %v439 = vor.u32 %v437, %v438
        %v440 = vshll.u32 2475754826, %v434
        %v441 = vshrl.u32 2131351028, %v435
        %v442 = vor.u32 %v440, %v441
        %v443 = vshll.u32 2131351028, %v434
        %v444 = vshrl.u32 2102212464, %v435
        %v445 = vor.u32 %v443, %v444
        %v446 = vshll.u32 2102212464, %v434
        %v447 = vshrl.u32 920167782, %v435
        %v448 = vor.u32 %v446, %v447
        %v449 = vshll.u32 920167782, %v434
        %v450 = vshrl.u32 1326507024, %v435
        %v451 = vor.u32 %v449, %v450
        %vm452 = vcmp.lt.s32.totalorder %v433, 1
        %vm453 = vcmp.lt.s32.totalorder %v433, 2
        %vm454 = vcmp.lt.s32.totalorder %v433, 3
        %vm455 = vcmp.lt.s32.totalorder %v433, 4
        %v456 = vsel %vm452, %v436, %v439
        %v457 = vsel %vm455, %v445, 2102212464
        %v458 = vsel %vm454, %v442, %v457
        %v459 = vsel %vm453, %v456, %v458
        %v460 = vsel %vm452, %v439, %v442
        %v461 = vsel %vm455, %v448, 920167782
        %v462 = vsel %vm454, %v445, %v461
        %v463 = vsel %vm453, %v460, %v462
        %v464 = vsel %vm452, %v442, %v445
        %v465 = vsel %vm455, %v451, 1326507024
        %v466 = vsel %vm454, %v448, %v465
        %v467 = vsel %vm453, %v464, %v466
        %v468 = vshll.u32 %v428, 8
        %v469 = vmul.u32.u64.compose %v468, %v467
        %v470 = vextract.low.u32 %v469
        %v471 = vextract.high.u32 %v469
        %v472 = vmul.u32.u64.compose %v468, %v463
        %v473 = vextract.low.u32 %v472
        %v474 = vextract.high.u32 %v472
        %v475 = vmul.u32 %v468, %v459
        %v476 = vadd.s32 %v471, %v473
        %vm477 = vc.u32 %v471, %v473
        %v478 = vadd.s32 %v474, 1
        %v479 = vsel %vm477, %v478, %v474
        %v480 = vadd.s32 %v475, %v479
        %v481 = vadd.s32 %v480, 536870912
        %v482 = vshrl.u32 %v481, 30
        %v483 = vshll.u32 %v482, 30
        %v484 = vsub.s32 %v480, %v483
        %vm485 = vcmp.lt.s32.totalorder %v484, 0
        %v486 = vsub.s32 0, %v484
        %v487 = vsel %vm485, %v486, %v484
        %v488 = vclz %v487
        %v489 = vsub.s32 %v488, 2
        %vm490 = vcmp.gt.s32.totalorder 0, %v489
        %v491 = vsel %vm490, 0, %v489
        %v492 = vsub.s32 32, %v491
        %v493 = vshll.u32 %v484, %v491
        %v494 = vshrl.u32 %v476, %v492
        %v495 = vor.u32 %v493, %v494
        %v496 = vsub.s32 4294967266, %v491
        %v497 = vadd.s32 %v496, 127
        %v498 = vshll.u32 %v497, 23
        %v499 = vor.u32 4788187, %v498
        %v500 = vand.u32 2147483647, %v499
        %v502 = vcvt.s32.f32 %v495
        %v503 = vmul.f32 %v502, %v500
        %v504 = vxor.u32 %v503, 2147483648
        %v505 = vsel %vm422, %v504, %v503
        %v506 = vsub.s32 4, %v482
        %v507 = vsel %vm422, %v506, %v482
        %v508 = vsel %vm421, %v314, %v505
        %v509 = vsel %vm421, 0, %v507
        %v510 = vcosq.f32.pop %v508
        %v511 = vsinq.f32.pop %v508
        %vm512 = vweird.f32 %v314
        %v513 = vand.u32 %v509, 3
        %vm514 = vcmp.lt.s32.totalorder %v513, 2
        %vm515 = vcmp.eq.s32.totalorder %v513, 0
        %v516 = vxor.u32 %v511, 2147483648
        %v517 = vsel %vm515, %v510, %v516
        %vm518 = vcmp.eq.s32.totalorder %v513, 2
        %v519 = vxor.u32 %v510, 2147483648
        %v520 = vsel %vm518, %v519, %v511
        %v521 = vsel %vm514, %v517, %v520
        %v522 = vsel %vm512, nan, %v521
        %v523 = vand.u32 2147483647, %v315
        %vm524 = vcmp.le.f32.partialorder %v523, 0.7853982
        %vm525 = vcmp.lt.s32.totalorder %v315, 0
        %v526 = vand.u32 %v315, 2139095040
        %v527 = vshrl.u32 %v526, 23
        %v528 = vsub.s32 %v527, 127
        %v529 = vand.u32 2147483647, %v315
        %v530 = vand.u32 %v529, 8388607
        %v531 = vor.u32 %v530, 8388608
        %v532 = vsub.s32 0, %v531
        %v533 = vadd.s32 %v528, 1
        %vm534 = vcmp.gt.s32.totalorder %v533, 0
        %v535 = vsel %vm534, %v533, 0
        %v536 = vshrl.u32 %v535, 5
        %v537 = vand.u32 %v535, 31
        %v538 = vsub.s32 32, %v537
        %v539 = vshrl.u32 683565275, %v538
        %v540 = vshll.u32 683565275, %v537
        %v541 = vshrl.u32 2475754826, %v538
        %v542 = vor.u32 %v540, %v541
        %v543 = vshll.u32 2475754826, %v537
        %v544 = vshrl.u32 2131351028, %v538
        %v545 = vor.u32 %v543, %v544
        %v546 = vshll.u32 2131351028, %v537
        %v547 = vshrl.u32 2102212464, %v538
        %v548 = vor.u32 %v546, %v547
        %v549 = vshll.u32 2102212464, %v537
        %v550 = vshrl.u32 920167782, %v538
        %v551 = vor.u32 %v549, %v550
        %v552 = vshll.u32 920167782, %v537
        %v553 = vshrl.u32 1326507024, %v538
        %v554 = vor.u32 %v552, %v553
        %vm555 = vcmp.lt.s32.totalorder %v536, 1
        %vm556 = vcmp.lt.s32.totalorder %v536, 2
        %vm557 = vcmp.lt.s32.totalorder %v536, 3
        %vm558 = vcmp.lt.s32.totalorder %v536, 4
        %v559 = vsel %vm555, %v539, %v542
        %v560 = vsel %vm558, %v548, 2102212464
        %v561 = vsel %vm557, %v545, %v560
        %v562 = vsel %vm556, %v559, %v561
        %v563 = vsel %vm555, %v542, %v545
        %v564 = vsel %vm558, %v551, 920167782
        %v565 = vsel %vm557, %v548, %v564
        %v566 = vsel %vm556, %v563, %v565
        %v567 = vsel %vm555, %v545, %v548
        %v568 = vsel %vm558, %v554, 1326507024
        %v569 = vsel %vm557, %v551, %v568
        %v570 = vsel %vm556, %v567, %v569
        %v571 = vshll.u32 %v531, 8
        %v572 = vmul.u32.u64.compose %v571, %v570
        %v573 = vextract.low.u32 %v572
        %v574 = vextract.high.u32 %v572
        %v575 = vmul.u32.u64.compose %v571, %v566
        %v576 = vextract.low.u32 %v575
        %v577 = vextract.high.u32 %v575
        %v578 = vmul.u32 %v571, %v562
        %v579 = vadd.s32 %v574, %v576
        %vm580 = vc.u32 %v574, %v576
        %v581 = vadd.s32 %v577, 1
        %v582 = vsel %vm580, %v581, %v577
        %v583 = vadd.s32 %v578, %v582
        %v584 = vadd.s32 %v583, 536870912
        %v585 = vshrl.u32 %v584, 30
        %v586 = vshll.u32 %v585, 30
        %v587 = vsub.s32 %v583, %v586
        %vm588 = vcmp.lt.s32.totalorder %v587, 0
        %v589 = vsub.s32 0, %v587
        %v590 = vsel %vm588, %v589, %v587
        %v591 = vclz %v590
        %v592 = vsub.s32 %v591, 2
        %vm593 = vcmp.gt.s32.totalorder 0, %v592
        %v594 = vsel %vm593, 0, %v592
        %v595 = vsub.s32 32, %v594
        %v596 = vshll.u32 %v587, %v594
        %v597 = vshrl.u32 %v579, %v595
        %v598 = vor.u32 %v596, %v597
        %v599 = vsub.s32 4294967266, %v594
        %v600 = vadd.s32 %v599, 127
        %v601 = vshll.u32 %v600, 23
        %v602 = vor.u32 4788187, %v601
        %v603 = vand.u32 2147483647, %v602
        %v605 = vcvt.s32.f32 %v598
        %v606 = vmul.f32 %v605, %v603
        %v607 = vxor.u32 %v606, 2147483648
        %v608 = vsel %vm525, %v607, %v606
        %v609 = vsub.s32 4, %v585
        %v610 = vsel %vm525, %v609, %v585
        %v611 = vsel %vm524, %v315, %v608
        %v612 = vsel %vm524, 0, %v610
        %v613 = vcosq.f32.pop %v611
        %v614 = vsinq.f32.pop %v611
        %vm615 = vweird.f32 %v315
        %v616 = vand.u32 %v612, 3
        %vm617 = vcmp.lt.s32.totalorder %v616, 2
        %vm618 = vcmp.eq.s32.totalorder %v616, 0
        %v619 = vxor.u32 %v614, 2147483648
        %v620 = vsel %vm618, %v613, %v619
        %vm621 = vcmp.eq.s32.totalorder %v616, 2
        %v622 = vxor.u32 %v613, 2147483648
        %v623 = vsel %vm621, %v622, %v614
        %v624 = vsel %vm617, %v620, %v623
        %v625 = vsel %vm615, nan, %v624
        %v626 = vand.u32 2147483647, %v316
        %vm627 = vcmp.le.f32.partialorder %v626, 0.7853982
        %vm628 = vcmp.lt.s32.totalorder %v316, 0
        %v629 = vand.u32 %v316, 2139095040
        %v630 = vshrl.u32 %v629, 23
        %v631 = vsub.s32 %v630, 127
        %v632 = vand.u32 2147483647, %v316
        %v633 = vand.u32 %v632, 8388607
        %v634 = vor.u32 %v633, 8388608
        %v635 = vsub.s32 0, %v634
        %v636 = vadd.s32 %v631, 1
        %vm637 = vcmp.gt.s32.totalorder %v636, 0
        %v638 = vsel %vm637, %v636, 0
        %v639 = vshrl.u32 %v638, 5
        %v640 = vand.u32 %v638, 31
        %v641 = vsub.s32 32, %v640
        %v642 = vshrl.u32 683565275, %v641
        %v643 = vshll.u32 683565275, %v640
        %v644 = vshrl.u32 2475754826, %v641
        %v645 = vor.u32 %v643, %v644
        %v646 = vshll.u32 2475754826, %v640
        %v647 = vshrl.u32 2131351028, %v641
        %v648 = vor.u32 %v646, %v647
        %v649 = vshll.u32 2131351028, %v640
        %v650 = vshrl.u32 2102212464, %v641
        %v651 = vor.u32 %v649, %v650
        %v652 = vshll.u32 2102212464, %v640
        %v653 = vshrl.u32 920167782, %v641
        %v654 = vor.u32 %v652, %v653
        %v655 = vshll.u32 920167782, %v640
        %v656 = vshrl.u32 1326507024, %v641
        %v657 = vor.u32 %v655, %v656
        %vm658 = vcmp.lt.s32.totalorder %v639, 1
        %vm659 = vcmp.lt.s32.totalorder %v639, 2
        %vm660 = vcmp.lt.s32.totalorder %v639, 3
        %vm661 = vcmp.lt.s32.totalorder %v639, 4
        %v662 = vsel %vm658, %v642, %v645
        %v663 = vsel %vm661, %v651, 2102212464
        %v664 = vsel %vm660, %v648, %v663
        %v665 = vsel %vm659, %v662, %v664
        %v666 = vsel %vm658, %v645, %v648
        %v667 = vsel %vm661, %v654, 920167782
        %v668 = vsel %vm660, %v651, %v667
        %v669 = vsel %vm659, %v666, %v668
        %v670 = vsel %vm658, %v648, %v651
        %v671 = vsel %vm661, %v657, 1326507024
        %v672 = vsel %vm660, %v654, %v671
        %v673 = vsel %vm659, %v670, %v672
        %v674 = vshll.u32 %v634, 8
        %v675 = vmul.u32.u64.compose %v674, %v673
        %v676 = vextract.low.u32 %v675
        %v677 = vextract.high.u32 %v675
        %v678 = vmul.u32.u64.compose %v674, %v669
        %v679 = vextract.low.u32 %v678
        %v680 = vextract.high.u32 %v678
        %v681 = vmul.u32 %v674, %v665
        %v682 = vadd.s32 %v677, %v679
        %vm683 = vc.u32 %v677, %v679
        %v684 = vadd.s32 %v680, 1
        %v685 = vsel %vm683, %v684, %v680
        %v686 = vadd.s32 %v681, %v685
        %v687 = vadd.s32 %v686, 536870912
        %v688 = vshrl.u32 %v687, 30
        %v689 = vshll.u32 %v688, 30
        %v690 = vsub.s32 %v686, %v689
        %vm691 = vcmp.lt.s32.totalorder %v690, 0
        %v692 = vsub.s32 0, %v690
        %v693 = vsel %vm691, %v692, %v690
        %v694 = vclz %v693
        %v695 = vsub.s32 %v694, 2
        %vm696 = vcmp.gt.s32.totalorder 0, %v695
        %v697 = vsel %vm696, 0, %v695
        %v698 = vsub.s32 32, %v697
        %v699 = vshll.u32 %v690, %v697
        %v700 = vshrl.u32 %v682, %v698
        %v701 = vor.u32 %v699, %v700
        %v702 = vsub.s32 4294967266, %v697
        %v703 = vadd.s32 %v702, 127
        %v704 = vshll.u32 %v703, 23
        %v705 = vor.u32 4788187, %v704
        %v706 = vand.u32 2147483647, %v705
        %v708 = vcvt.s32.f32 %v701
        %v709 = vmul.f32 %v708, %v706
        %v710 = vxor.u32 %v709, 2147483648
        %v711 = vsel %vm628, %v710, %v709
        %v712 = vsub.s32 4, %v688
        %v713 = vsel %vm628, %v712, %v688
        %v714 = vsel %vm627, %v316, %v711
        %v715 = vsel %vm627, 0, %v713
        %v716 = vcosq.f32.pop %v714
        %v717 = vsinq.f32.pop %v714
        %vm718 = vweird.f32 %v316
        %v719 = vand.u32 %v715, 3
        %vm720 = vcmp.lt.s32.totalorder %v719, 2
        %vm721 = vcmp.eq.s32.totalorder %v719, 0
        %v722 = vxor.u32 %v717, 2147483648
        %v723 = vsel %vm721, %v716, %v722
        %vm724 = vcmp.eq.s32.totalorder %v719, 2
        %v725 = vxor.u32 %v716, 2147483648
        %v726 = vsel %vm724, %v725, %v717
        %v727 = vsel %vm720, %v723, %v726
        %v728 = vsel %vm718, nan, %v727
        %v729 = vmul.f32 %v309, %v419
        %v730 = vmul.f32 %v310, %v522
        %v731 = vmul.f32 %v311, %v625
        %v732 = vmul.f32 %v312, %v728
        %v733 = vand.u32 2147483647, %v313
        %vm734 = vcmp.le.f32.partialorder %v733, 0.7853982
        %vm735 = vcmp.lt.s32.totalorder %v313, 0
        %v736 = vand.u32 %v313, 2139095040
        %v737 = vshrl.u32 %v736, 23
        %v738 = vsub.s32 %v737, 127
        %v739 = vand.u32 2147483647, %v313
        %v740 = vand.u32 %v739, 8388607
        %v741 = vor.u32 %v740, 8388608
        %v742 = vsub.s32 0, %v741
        %v743 = vadd.s32 %v738, 1
        %vm744 = vcmp.gt.s32.totalorder %v743, 0
        %v745 = vsel %vm744, %v743, 0
        %v746 = vshrl.u32 %v745, 5
        %v747 = vand.u32 %v745, 31
        %v748 = vsub.s32 32, %v747
        %v749 = vshrl.u32 683565275, %v748
        %v750 = vshll.u32 683565275, %v747
        %v751 = vshrl.u32 2475754826, %v748
        %v752 = vor.u32 %v750, %v751
        %v753 = vshll.u32 2475754826, %v747
        %v754 = vshrl.u32 2131351028, %v748
        %v755 = vor.u32 %v753, %v754
        %v756 = vshll.u32 2131351028, %v747
        %v757 = vshrl.u32 2102212464, %v748
        %v758 = vor.u32 %v756, %v757
        %v759 = vshll.u32 2102212464, %v747
        %v760 = vshrl.u32 920167782, %v748
        %v761 = vor.u32 %v759, %v760
        %v762 = vshll.u32 920167782, %v747
        %v763 = vshrl.u32 1326507024, %v748
        %v764 = vor.u32 %v762, %v763
        %vm765 = vcmp.lt.s32.totalorder %v746, 1
        %vm766 = vcmp.lt.s32.totalorder %v746, 2
        %vm767 = vcmp.lt.s32.totalorder %v746, 3
        %vm768 = vcmp.lt.s32.totalorder %v746, 4
        %v769 = vsel %vm765, %v749, %v752
        %v770 = vsel %vm768, %v758, 2102212464
        %v771 = vsel %vm767, %v755, %v770
        %v772 = vsel %vm766, %v769, %v771
        %v773 = vsel %vm765, %v752, %v755
        %v774 = vsel %vm768, %v761, 920167782
        %v775 = vsel %vm767, %v758, %v774
        %v776 = vsel %vm766, %v773, %v775
        %v777 = vsel %vm765, %v755, %v758
        %v778 = vsel %vm768, %v764, 1326507024
        %v779 = vsel %vm767, %v761, %v778
        %v780 = vsel %vm766, %v777, %v779
        %v781 = vshll.u32 %v741, 8
        %v782 = vmul.u32.u64.compose %v781, %v780
        %v783 = vextract.low.u32 %v782
        %v784 = vextract.high.u32 %v782
        %v785 = vmul.u32.u64.compose %v781, %v776
        %v786 = vextract.low.u32 %v785
        %v787 = vextract.high.u32 %v785
        %v788 = vmul.u32 %v781, %v772
        %v789 = vadd.s32 %v784, %v786
        %vm790 = vc.u32 %v784, %v786
        %v791 = vadd.s32 %v787, 1
        %v792 = vsel %vm790, %v791, %v787
        %v793 = vadd.s32 %v788, %v792
        %v794 = vadd.s32 %v793, 536870912
        %v795 = vshrl.u32 %v794, 30
        %v796 = vshll.u32 %v795, 30
        %v797 = vsub.s32 %v793, %v796
        %vm798 = vcmp.lt.s32.totalorder %v797, 0
        %v799 = vsub.s32 0, %v797
        %v800 = vsel %vm798, %v799, %v797
        %v801 = vclz %v800
        %v802 = vsub.s32 %v801, 2
        %vm803 = vcmp.gt.s32.totalorder 0, %v802
        %v804 = vsel %vm803, 0, %v802
        %v805 = vsub.s32 32, %v804
        %v806 = vshll.u32 %v797, %v804
        %v807 = vshrl.u32 %v789, %v805
        %v808 = vor.u32 %v806, %v807
        %v809 = vsub.s32 4294967266, %v804
        %v810 = vadd.s32 %v809, 127
        %v811 = vshll.u32 %v810, 23
        %v812 = vor.u32 4788187, %v811
        %v813 = vand.u32 2147483647, %v812
        %v815 = vcvt.s32.f32 %v808
        %v816 = vmul.f32 %v815, %v813
        %v817 = vxor.u32 %v816, 2147483648
        %v818 = vsel %vm735, %v817, %v816
        %v819 = vsub.s32 4, %v795
        %v820 = vsel %vm735, %v819, %v795
        %v821 = vsel %vm734, %v313, %v818
        %v822 = vsel %vm734, 0, %v820
        %v823 = vcosq.f32.pop %v821
        %v824 = vsinq.f32.pop %v821
        %vm825 = vweird.f32 %v313
        %v826 = vadd.s32 %v822, 3
        %v827 = vand.u32 %v826, 3
        %vm828 = vcmp.lt.s32.totalorder %v827, 2
        %vm829 = vcmp.eq.s32.totalorder %v827, 0
        %v830 = vxor.u32 %v824, 2147483648
        %v831 = vsel %vm829, %v823, %v830
        %vm832 = vcmp.eq.s32.totalorder %v827, 2
        %v833 = vxor.u32 %v823, 2147483648
        %v834 = vsel %vm832, %v833, %v824
        %v835 = vsel %vm828, %v831, %v834
        %v836 = vsel %vm825, nan, %v835
        %v837 = vand.u32 2147483647, %v314
        %vm838 = vcmp.le.f32.partialorder %v837, 0.7853982
        %vm839 = vcmp.lt.s32.totalorder %v314, 0
        %v840 = vand.u32 %v314, 2139095040
        %v841 = vshrl.u32 %v840, 23
        %v842 = vsub.s32 %v841, 127
        %v843 = vand.u32 2147483647, %v314
        %v844 = vand.u32 %v843, 8388607
        %v845 = vor.u32 %v844, 8388608
        %v846 = vsub.s32 0, %v845
        %v847 = vadd.s32 %v842, 1
        %vm848 = vcmp.gt.s32.totalorder %v847, 0
        %v849 = vsel %vm848, %v847, 0
        %v850 = vshrl.u32 %v849, 5
        %v851 = vand.u32 %v849, 31
        %v852 = vsub.s32 32, %v851
        %v853 = vshrl.u32 683565275, %v852
        %v854 = vshll.u32 683565275, %v851
        %v855 = vshrl.u32 2475754826, %v852
        %v856 = vor.u32 %v854, %v855
        %v857 = vshll.u32 2475754826, %v851
        %v858 = vshrl.u32 2131351028, %v852
        %v859 = vor.u32 %v857, %v858
        %v860 = vshll.u32 2131351028, %v851
        %v861 = vshrl.u32 2102212464, %v852
        %v862 = vor.u32 %v860, %v861
        %v863 = vshll.u32 2102212464, %v851
        %v864 = vshrl.u32 920167782, %v852
        %v865 = vor.u32 %v863, %v864
        %v866 = vshll.u32 920167782, %v851
        %v867 = vshrl.u32 1326507024, %v852
        %v868 = vor.u32 %v866, %v867
        %vm869 = vcmp.lt.s32.totalorder %v850, 1
        %vm870 = vcmp.lt.s32.totalorder %v850, 2
        %vm871 = vcmp.lt.s32.totalorder %v850, 3
        %vm872 = vcmp.lt.s32.totalorder %v850, 4
        %v873 = vsel %vm869, %v853, %v856
        %v874 = vsel %vm872, %v862, 2102212464
        %v875 = vsel %vm871, %v859, %v874
        %v876 = vsel %vm870, %v873, %v875
        %v877 = vsel %vm869, %v856, %v859
        %v878 = vsel %vm872, %v865, 920167782
        %v879 = vsel %vm871, %v862, %v878
        %v880 = vsel %vm870, %v877, %v879
        %v881 = vsel %vm869, %v859, %v862
        %v882 = vsel %vm872, %v868, 1326507024
        %v883 = vsel %vm871, %v865, %v882
        %v884 = vsel %vm870, %v881, %v883
        %v885 = vshll.u32 %v845, 8
        %v886 = vmul.u32.u64.compose %v885, %v884
        %v887 = vextract.low.u32 %v886
        %v888 = vextract.high.u32 %v886
        %v889 = vmul.u32.u64.compose %v885, %v880
        %v890 = vextract.low.u32 %v889
        %v891 = vextract.high.u32 %v889
        %v892 = vmul.u32 %v885, %v876
        %v893 = vadd.s32 %v888, %v890
        %vm894 = vc.u32 %v888, %v890
        %v895 = vadd.s32 %v891, 1
        %v896 = vsel %vm894, %v895, %v891
        %v897 = vadd.s32 %v892, %v896
        %v898 = vadd.s32 %v897, 536870912
        %v899 = vshrl.u32 %v898, 30
        %v900 = vshll.u32 %v899, 30
        %v901 = vsub.s32 %v897, %v900
        %vm902 = vcmp.lt.s32.totalorder %v901, 0
        %v903 = vsub.s32 0, %v901
        %v904 = vsel %vm902, %v903, %v901
        %v905 = vclz %v904
        %v906 = vsub.s32 %v905, 2
        %vm907 = vcmp.gt.s32.totalorder 0, %v906
        %v908 = vsel %vm907, 0, %v906
        %v909 = vsub.s32 32, %v908
        %v910 = vshll.u32 %v901, %v908
        %v911 = vshrl.u32 %v893, %v909
        %v912 = vor.u32 %v910, %v911
        %v913 = vsub.s32 4294967266, %v908
        %v914 = vadd.s32 %v913, 127
        %v915 = vshll.u32 %v914, 23
        %v916 = vor.u32 4788187, %v915
        %v917 = vand.u32 2147483647, %v916
        %v919 = vcvt.s32.f32 %v912
        %v920 = vmul.f32 %v919, %v917
        %v921 = vxor.u32 %v920, 2147483648
        %v922 = vsel %vm839, %v921, %v920
        %v923 = vsub.s32 4, %v899
        %v924 = vsel %vm839, %v923, %v899
        %v925 = vsel %vm838, %v314, %v922
        %v926 = vsel %vm838, 0, %v924
        %v927 = vcosq.f32.pop %v925
        %v928 = vsinq.f32.pop %v925
        %vm929 = vweird.f32 %v314
        %v930 = vadd.s32 %v926, 3
        %v931 = vand.u32 %v930, 3
        %vm932 = vcmp.lt.s32.totalorder %v931, 2
        %vm933 = vcmp.eq.s32.totalorder %v931, 0
        %v934 = vxor.u32 %v928, 2147483648
        %v935 = vsel %vm933, %v927, %v934
        %vm936 = vcmp.eq.s32.totalorder %v931, 2
        %v937 = vxor.u32 %v927, 2147483648
        %v938 = vsel %vm936, %v937, %v928
        %v939 = vsel %vm932, %v935, %v938
        %v940 = vsel %vm929, nan, %v939
        %v941 = vand.u32 2147483647, %v315
        %vm942 = vcmp.le.f32.partialorder %v941, 0.7853982
        %vm943 = vcmp.lt.s32.totalorder %v315, 0
        %v944 = vand.u32 %v315, 2139095040
        %v945 = vshrl.u32 %v944, 23
        %v946 = vsub.s32 %v945, 127
        %v947 = vand.u32 2147483647, %v315
        %v948 = vand.u32 %v947, 8388607
        %v949 = vor.u32 %v948, 8388608
        %v950 = vsub.s32 0, %v949
        %v951 = vadd.s32 %v946, 1
        %vm952 = vcmp.gt.s32.totalorder %v951, 0
        %v953 = vsel %vm952, %v951, 0
        %v954 = vshrl.u32 %v953, 5
        %v955 = vand.u32 %v953, 31
        %v956 = vsub.s32 32, %v955
        %v957 = vshrl.u32 683565275, %v956
        %v958 = vshll.u32 683565275, %v955
        %v959 = vshrl.u32 2475754826, %v956
        %v960 = vor.u32 %v958, %v959
        %v961 = vshll.u32 2475754826, %v955
        %v962 = vshrl.u32 2131351028, %v956
        %v963 = vor.u32 %v961, %v962
        %v964 = vshll.u32 2131351028, %v955
        %v965 = vshrl.u32 2102212464, %v956
        %v966 = vor.u32 %v964, %v965
        %v967 = vshll.u32 2102212464, %v955
        %v968 = vshrl.u32 920167782, %v956
        %v969 = vor.u32 %v967, %v968
        %v970 = vshll.u32 920167782, %v955
        %v971 = vshrl.u32 1326507024, %v956
        %v972 = vor.u32 %v970, %v971
        %vm973 = vcmp.lt.s32.totalorder %v954, 1
        %vm974 = vcmp.lt.s32.totalorder %v954, 2
        %vm975 = vcmp.lt.s32.totalorder %v954, 3
        %vm976 = vcmp.lt.s32.totalorder %v954, 4
        %v977 = vsel %vm973, %v957, %v960
        %v978 = vsel %vm976, %v966, 2102212464
        %v979 = vsel %vm975, %v963, %v978
        %v980 = vsel %vm974, %v977, %v979
        %v981 = vsel %vm973, %v960, %v963
        %v982 = vsel %vm976, %v969, 920167782
        %v983 = vsel %vm975, %v966, %v982
        %v984 = vsel %vm974, %v981, %v983
        %v985 = vsel %vm973, %v963, %v966
        %v986 = vsel %vm976, %v972, 1326507024
        %v987 = vsel %vm975, %v969, %v986
        %v988 = vsel %vm974, %v985, %v987
        %v989 = vshll.u32 %v949, 8
        %v990 = vmul.u32.u64.compose %v989, %v988
        %v991 = vextract.low.u32 %v990
        %v992 = vextract.high.u32 %v990
        %v993 = vmul.u32.u64.compose %v989, %v984
        %v994 = vextract.low.u32 %v993
        %v995 = vextract.high.u32 %v993
        %v996 = vmul.u32 %v989, %v980
        %v997 = vadd.s32 %v992, %v994
        %vm998 = vc.u32 %v992, %v994
        %v999 = vadd.s32 %v995, 1
        %v1000 = vsel %vm998, %v999, %v995
        %v1001 = vadd.s32 %v996, %v1000
        %v1002 = vadd.s32 %v1001, 536870912
        %v1003 = vshrl.u32 %v1002, 30
        %v1004 = vshll.u32 %v1003, 30
        %v1005 = vsub.s32 %v1001, %v1004
        %vm1006 = vcmp.lt.s32.totalorder %v1005, 0
        %v1007 = vsub.s32 0, %v1005
        %v1008 = vsel %vm1006, %v1007, %v1005
        %v1009 = vclz %v1008
        %v1010 = vsub.s32 %v1009, 2
        %vm1011 = vcmp.gt.s32.totalorder 0, %v1010
        %v1012 = vsel %vm1011, 0, %v1010
        %v1013 = vsub.s32 32, %v1012
        %v1014 = vshll.u32 %v1005, %v1012
        %v1015 = vshrl.u32 %v997, %v1013
        %v1016 = vor.u32 %v1014, %v1015
        %v1017 = vsub.s32 4294967266, %v1012
        %v1018 = vadd.s32 %v1017, 127
        %v1019 = vshll.u32 %v1018, 23
        %v1020 = vor.u32 4788187, %v1019
        %v1021 = vand.u32 2147483647, %v1020
        %v1023 = vcvt.s32.f32 %v1016
        %v1024 = vmul.f32 %v1023, %v1021
        %v1025 = vxor.u32 %v1024, 2147483648
        %v1026 = vsel %vm943, %v1025, %v1024
        %v1027 = vsub.s32 4, %v1003
        %v1028 = vsel %vm943, %v1027, %v1003
        %v1029 = vsel %vm942, %v315, %v1026
        %v1030 = vsel %vm942, 0, %v1028
        %v1031 = vcosq.f32.pop %v1029
        %v1032 = vsinq.f32.pop %v1029
        %vm1033 = vweird.f32 %v315
        %v1034 = vadd.s32 %v1030, 3
        %v1035 = vand.u32 %v1034, 3
        %vm1036 = vcmp.lt.s32.totalorder %v1035, 2
        %vm1037 = vcmp.eq.s32.totalorder %v1035, 0
        %v1038 = vxor.u32 %v1032, 2147483648
        %v1039 = vsel %vm1037, %v1031, %v1038
        %vm1040 = vcmp.eq.s32.totalorder %v1035, 2
        %v1041 = vxor.u32 %v1031, 2147483648
        %v1042 = vsel %vm1040, %v1041, %v1032
        %v1043 = vsel %vm1036, %v1039, %v1042
        %v1044 = vsel %vm1033, nan, %v1043
        %v1045 = vand.u32 2147483647, %v316
        %vm1046 = vcmp.le.f32.partialorder %v1045, 0.7853982
        %vm1047 = vcmp.lt.s32.totalorder %v316, 0
        %v1048 = vand.u32 %v316, 2139095040
        %v1049 = vshrl.u32 %v1048, 23
        %v1050 = vsub.s32 %v1049, 127
        %v1051 = vand.u32 2147483647, %v316
        %v1052 = vand.u32 %v1051, 8388607
        %v1053 = vor.u32 %v1052, 8388608
        %v1054 = vsub.s32 0, %v1053
        %v1055 = vadd.s32 %v1050, 1
        %vm1056 = vcmp.gt.s32.totalorder %v1055, 0
        %v1057 = vsel %vm1056, %v1055, 0
        %v1058 = vshrl.u32 %v1057, 5
        %v1059 = vand.u32 %v1057, 31
        %v1060 = vsub.s32 32, %v1059
        %v1061 = vshrl.u32 683565275, %v1060
        %v1062 = vshll.u32 683565275, %v1059
        %v1063 = vshrl.u32 2475754826, %v1060
        %v1064 = vor.u32 %v1062, %v1063
        %v1065 = vshll.u32 2475754826, %v1059
        %v1066 = vshrl.u32 2131351028, %v1060
        %v1067 = vor.u32 %v1065, %v1066
        %v1068 = vshll.u32 2131351028, %v1059
        %v1069 = vshrl.u32 2102212464, %v1060
        %v1070 = vor.u32 %v1068, %v1069
        %v1071 = vshll.u32 2102212464, %v1059
        %v1072 = vshrl.u32 920167782, %v1060
        %v1073 = vor.u32 %v1071, %v1072
        %v1074 = vshll.u32 920167782, %v1059
        %v1075 = vshrl.u32 1326507024, %v1060
        %v1076 = vor.u32 %v1074, %v1075
        %vm1077 = vcmp.lt.s32.totalorder %v1058, 1
        %vm1078 = vcmp.lt.s32.totalorder %v1058, 2
        %vm1079 = vcmp.lt.s32.totalorder %v1058, 3
        %vm1080 = vcmp.lt.s32.totalorder %v1058, 4
        %v1081 = vsel %vm1077, %v1061, %v1064
        %v1082 = vsel %vm1080, %v1070, 2102212464
        %v1083 = vsel %vm1079, %v1067, %v1082
        %v1084 = vsel %vm1078, %v1081, %v1083
        %v1085 = vsel %vm1077, %v1064, %v1067
        %v1086 = vsel %vm1080, %v1073, 920167782
        %v1087 = vsel %vm1079, %v1070, %v1086
        %v1088 = vsel %vm1078, %v1085, %v1087
        %v1089 = vsel %vm1077, %v1067, %v1070
        %v1090 = vsel %vm1080, %v1076, 1326507024
        %v1091 = vsel %vm1079, %v1073, %v1090
        %v1092 = vsel %vm1078, %v1089, %v1091
        %v1093 = vshll.u32 %v1053, 8
        %v1094 = vmul.u32.u64.compose %v1093, %v1092
        %v1095 = vextract.low.u32 %v1094
        %v1096 = vextract.high.u32 %v1094
        %v1097 = vmul.u32.u64.compose %v1093, %v1088
        %v1098 = vextract.low.u32 %v1097
        %v1099 = vextract.high.u32 %v1097
        %v1100 = vmul.u32 %v1093, %v1084
        %v1101 = vadd.s32 %v1096, %v1098
        %vm1102 = vc.u32 %v1096, %v1098
        %v1103 = vadd.s32 %v1099, 1
        %v1104 = vsel %vm1102, %v1103, %v1099
        %v1105 = vadd.s32 %v1100, %v1104
        %v1106 = vadd.s32 %v1105, 536870912
        %v1107 = vshrl.u32 %v1106, 30
        %v1108 = vshll.u32 %v1107, 30
        %v1109 = vsub.s32 %v1105, %v1108
        %vm1110 = vcmp.lt.s32.totalorder %v1109, 0
        %v1111 = vsub.s32 0, %v1109
        %v1112 = vsel %vm1110, %v1111, %v1109
        %v1113 = vclz %v1112
        %v1114 = vsub.s32 %v1113, 2
        %vm1115 = vcmp.gt.s32.totalorder 0, %v1114
        %v1116 = vsel %vm1115, 0, %v1114
        %v1117 = vsub.s32 32, %v1116
        %v1118 = vshll.u32 %v1109, %v1116
        %v1119 = vshrl.u32 %v1101, %v1117
        %v1120 = vor.u32 %v1118, %v1119
        %v1121 = vsub.s32 4294967266, %v1116
        %v1122 = vadd.s32 %v1121, 127
        %v1123 = vshll.u32 %v1122, 23
        %v1124 = vor.u32 4788187, %v1123
        %v1125 = vand.u32 2147483647, %v1124
        %v1127 = vcvt.s32.f32 %v1120
        %v1128 = vmul.f32 %v1127, %v1125
        %v1129 = vxor.u32 %v1128, 2147483648
        %v1130 = vsel %vm1047, %v1129, %v1128
        %v1131 = vsub.s32 4, %v1107
        %v1132 = vsel %vm1047, %v1131, %v1107
        %v1133 = vsel %vm1046, %v316, %v1130
        %v1134 = vsel %vm1046, 0, %v1132
        %v1135 = vcosq.f32.pop %v1133
        %v1136 = vsinq.f32.pop %v1133
        %vm1137 = vweird.f32 %v316
        %v1138 = vadd.s32 %v1134, 3
        %v1139 = vand.u32 %v1138, 3
        %vm1140 = vcmp.lt.s32.totalorder %v1139, 2
        %vm1141 = vcmp.eq.s32.totalorder %v1139, 0
        %v1142 = vxor.u32 %v1136, 2147483648
        %v1143 = vsel %vm1141, %v1135, %v1142
        %vm1144 = vcmp.eq.s32.totalorder %v1139, 2
        %v1145 = vxor.u32 %v1135, 2147483648
        %v1146 = vsel %vm1144, %v1145, %v1136
        %v1147 = vsel %vm1140, %v1143, %v1146
        %v1148 = vsel %vm1137, nan, %v1147
        %v1149 = vmul.f32 %v309, %v836
        %v1150 = vmul.f32 %v310, %v940
        %v1151 = vmul.f32 %v311, %v1044
        %v1152 = vmul.f32 %v312, %v1148
        %v1153 = vld [vmem:[#allocation7] sm:$0xff]
        %v1154 = vld [vmem:[#allocation7 + $0x8] sm:$0xff]
        %v1155 = vld [vmem:[#allocation7 + $0x10] sm:$0xff]
        %v1156 = vld [vmem:[#allocation7 + $0x18] sm:$0xff]
        %vm1157 = vcmask 261120
        %v1159 = vsel %vm1157, %v1153, 0
        %v1162 = vsel %vm1157, %v1154, 0
        %v1165 = vsel %vm1157, %v1155, 0
        %v1168 = vsel %vm1157, %v1156, 0
        %v1170 = vand.u32 %v730, 4294901760
        %1171 = vmatprep.subr.mxu0 %v1170
        %v1172 = vand.u32 %v729, 4294901760
        %1173 = vmatpush1.msra.mxu0 %v1172
        %v1174 = vand.u32 %v732, 4294901760
        %1175 = vmatprep.subr.mxu0 %v1174
        %v1176 = vand.u32 %v731, 4294901760
        %1177 = vmatpush1.msra.mxu0 %v1176
        %v1178 = vand.u32 %v1150, 4294901760
        %1179 = vmatprep.subr.mxu0 %v1178
        %v1180 = vand.u32 %v1149, 4294901760
        %1181 = vmatpush1.msra.mxu0 %v1180
        %v1182 = vand.u32 %v1152, 4294901760
        %1183 = vmatprep.subr.mxu0 %v1182
        %v1184 = vand.u32 %v1151, 4294901760
        %1185 = vmatpush1.msra.mxu0 %v1184
        %1186 = vmatprep.subr.mxu0 0.0
        %1187 = vmatpush1.msra.mxu0 0.0
        %1188 = vmatprep.subr.mxu0 0.0
        %1189 = vmatpush1.msra.mxu0 0.0
        %1190 = vmatprep.subr.mxu0 0.0
        %1191 = vmatpush1.msra.mxu0 0.0
        %1192 = vmatprep.subr.mxu0 0.0
        %1193 = vmatpush1.msra.mxu0 0.0
        %1194 = vmatprep.subr.mxu0 0.0
        %1195 = vmatpush1.msra.mxu0 0.0
        %1196 = vmatprep.subr.mxu0 0.0
        %1197 = vmatpush1.msra.mxu0 0.0
        %1198 = vmatprep.subr.mxu0 0.0
        %1199 = vmatpush1.msra.mxu0 0.0
        %1200 = vmatprep.subr.mxu0 0.0
        %1201 = vmatpush1.msra.mxu0 0.0
        %1202 = vmatprep.subr.mxu0 0.0
        %1203 = vmatpush1.msra.mxu0 0.0
        %1204 = vmatprep.subr.mxu0 0.0
        %1205 = vmatpush1.msra.mxu0 0.0
        %1206 = vmatprep.subr.mxu0 0.0
        %1207 = vmatpush1.msra.mxu0 0.0
        %1208 = vmatprep.subr.mxu0 0.0
        %1209 = vmatpush1.msra.mxu0 0.0
        %1210 = vmatprep.subr.mxu0 0.0
        %1211 = vmatpush1.msra.mxu0 0.0
        %1212 = vmatprep.subr.mxu0 0.0
        %1213 = vmatpush1.msra.mxu0 0.0
        %1214 = vmatprep.subr.mxu0 0.0
        %1215 = vmatpush1.msra.mxu0 0.0
        %1216 = vmatprep.subr.mxu0 0.0
        %1217 = vmatpush1.msra.mxu0 0.0
        %1218 = vmatprep.subr.mxu0 0.0
        %1219 = vmatpush1.msra.mxu0 0.0
        %1220 = vmatprep.subr.mxu0 0.0
        %1221 = vmatpush1.msra.mxu0 0.0
        %1222 = vmatprep.subr.mxu0 0.0
        %1223 = vmatpush1.msra.mxu0 0.0
        %1224 = vmatprep.subr.mxu0 0.0
        %1225 = vmatpush1.msra.mxu0 0.0
        %1226 = vmatprep.subr.mxu0 0.0
        %1227 = vmatpush1.msra.mxu0 0.0
        %1228 = vmatprep.subr.mxu0 0.0
        %1229 = vmatpush1.msra.mxu0 0.0
        %1230 = vmatprep.subr.mxu0 0.0
        %1231 = vmatpush1.msra.mxu0 0.0
        %1232 = vmatprep.subr.mxu0 0.0
        %1233 = vmatpush1.msra.mxu0 0.0
        %1234 = vmatprep.subr.mxu0 0.0
        %1235 = vmatpush1.msra.mxu0 0.0
        %1236 = vmatprep.subr.mxu0 0.0
        %1237 = vmatpush1.msra.mxu0 0.0
        %1238 = vmatprep.subr.mxu0 0.0
        %1239 = vmatpush1.msra.mxu0 0.0
        %1240 = vmatprep.subr.mxu0 0.0
        %1241 = vmatpush1.msra.mxu0 0.0
        %1242 = vmatprep.mubr.f32.mxu0 0.0
        %v1243 = vand.u32 %v1159, 4294901760
        %v1244 = vsub.f32 %v1159, %v1243
        %v1245 = vand.u32 %v1244, 4294901760
        %v1246 = vsub.f32 %v1244, %v1245
        %v1247 = vand.u32 %v1246, 4294901760
        %1248 = vmatmul.mubr.f32.gmra.mrb[0].mxu0 %v1247
        %v1249 = vpop.f32.mrb[0].mxu0
        %v1250 = vadd.f32 0.0, %v1249
        %v1251 = vpop.f32.mrb[0].mxu0
        %v1252 = vadd.f32 0.0, %v1251
        %1253 = vmatprep.mubr.f32.mxu0 0.0
        %v1254 = vand.u32 %v1162, 4294901760
        %v1255 = vsub.f32 %v1162, %v1254
        %v1256 = vand.u32 %v1255, 4294901760
        %v1257 = vsub.f32 %v1255, %v1256
        %v1258 = vand.u32 %v1257, 4294901760
        %1259 = vmatmul.mubr.f32.gmra.mrb[0].mxu0 %v1258
        %v1260 = vpop.f32.mrb[0].mxu0
        %v1261 = vadd.f32 0.0, %v1260
        %v1262 = vpop.f32.mrb[0].mxu0
        %v1263 = vadd.f32 0.0, %v1262
        %1264 = vmatprep.mubr.f32.mxu0 0.0
        %v1265 = vand.u32 %v1165, 4294901760
        %v1266 = vsub.f32 %v1165, %v1265
        %v1267 = vand.u32 %v1266, 4294901760
        %v1268 = vsub.f32 %v1266, %v1267
        %v1269 = vand.u32 %v1268, 4294901760
        %1270 = vmatmul.mubr.f32.gmra.mrb[0].mxu0 %v1269
        %v1271 = vpop.f32.mrb[0].mxu0
        %v1272 = vadd.f32 0.0, %v1271
        %v1273 = vpop.f32.mrb[0].mxu0
        %v1274 = vadd.f32 0.0, %v1273
        %1275 = vmatprep.mubr.f32.mxu0 0.0
        %v1276 = vand.u32 %v1168, 4294901760
        %v1277 = vsub.f32 %v1168, %v1276
        %v1278 = vand.u32 %v1277, 4294901760
        %v1279 = vsub.f32 %v1277, %v1278
        %v1280 = vand.u32 %v1279, 4294901760
        %1281 = vmatmul.mubr.f32.gmra.mrb[0].mxu0 %v1280
        %v1282 = vpop.f32.mrb[0].mxu0
        %v1283 = vadd.f32 0.0, %v1282
        %v1284 = vpop.f32.mrb[0].mxu0
        %1285 = vdwg.mxu0
        %v1286 = vand.u32 %v730, 4294901760
        %v1287 = vsub.f32 %v730, %v1286
        %v1288 = vand.u32 %v1287, 4294901760
        %v1289 = vsub.f32 %v1287, %v1288
        %v1290 = vand.u32 %v1289, 4294901760
        %1291 = vmatprep.subr.mxu0 %v1290
        %v1292 = vand.u32 %v729, 4294901760
        %v1293 = vsub.f32 %v729, %v1292
        %v1294 = vand.u32 %v1293, 4294901760
        %v1295 = vsub.f32 %v1293, %v1294
        %v1296 = vand.u32 %v1295, 4294901760
        %1297 = vmatpush1.msra.mxu0 %v1296
        %v1298 = vand.u32 %v732, 4294901760
        %v1299 = vsub.f32 %v732, %v1298
        %v1300 = vand.u32 %v1299, 4294901760
        %v1301 = vsub.f32 %v1299, %v1300
        %v1302 = vand.u32 %v1301, 4294901760
        %1303 = vmatprep.subr.mxu0 %v1302
        %v1304 = vand.u32 %v731, 4294901760
        %v1305 = vsub.f32 %v731, %v1304
        %v1306 = vand.u32 %v1305, 4294901760
        %v1307 = vsub.f32 %v1305, %v1306
        %v1308 = vand.u32 %v1307, 4294901760
        %1309 = vmatpush1.msra.mxu0 %v1308
        %v1310 = vand.u32 %v1150, 4294901760
        %v1311 = vsub.f32 %v1150, %v1310
        %v1312 = vand.u32 %v1311, 4294901760
        %v1313 = vsub.f32 %v1311, %v1312
        %v1314 = vand.u32 %v1313, 4294901760
        %1315 = vmatprep.subr.mxu0 %v1314
        %v1316 = vand.u32 %v1149, 4294901760
        %v1317 = vsub.f32 %v1149, %v1316
        %v1318 = vand.u32 %v1317, 4294901760
        %v1319 = vsub.f32 %v1317, %v1318
        %v1320 = vand.u32 %v1319, 4294901760
        %1321 = vmatpush1.msra.mxu0 %v1320
        %v1322 = vand.u32 %v1152, 4294901760
        %v1323 = vsub.f32 %v1152, %v1322
        %v1324 = vand.u32 %v1323, 4294901760
        %v1325 = vsub.f32 %v1323, %v1324
        %v1326 = vand.u32 %v1325, 4294901760
        %1327 = vmatprep.subr.mxu0 %v1326
        %v1328 = vand.u32 %v1151, 4294901760
        %v1329 = vsub.f32 %v1151, %v1328
        %v1330 = vand.u32 %v1329, 4294901760
        %v1331 = vsub.f32 %v1329, %v1330
        %v1332 = vand.u32 %v1331, 4294901760
        %1333 = vmatpush1.msra.mxu0 %v1332
        %1334 = vmatprep.subr.mxu0 0.0
        %1335 = vmatpush1.msra.mxu0 0.0
        %1336 = vmatprep.subr.mxu0 0.0
        %1337 = vmatpush1.msra.mxu0 0.0
        %1338 = vmatprep.subr.mxu0 0.0
        %1339 = vmatpush1.msra.mxu0 0.0
        %1340 = vmatprep.subr.mxu0 0.0
        %1341 = vmatpush1.msra.mxu0 0.0
        %1342 = vmatprep.subr.mxu0 0.0
        %1343 = vmatpush1.msra.mxu0 0.0
        %1344 = vmatprep.subr.mxu0 0.0
        %1345 = vmatpush1.msra.mxu0 0.0
        %1346 = vmatprep.subr.mxu0 0.0
        %1347 = vmatpush1.msra.mxu0 0.0
        %1348 = vmatprep.subr.mxu0 0.0
        %1349 = vmatpush1.msra.mxu0 0.0
        %1350 = vmatprep.subr.mxu0 0.0
        %1351 = vmatpush1.msra.mxu0 0.0
        %1352 = vmatprep.subr.mxu0 0.0
        %1353 = vmatpush1.msra.mxu0 0.0
        %1354 = vmatprep.subr.mxu0 0.0
        %1355 = vmatpush1.msra.mxu0 0.0
        %1356 = vmatprep.subr.mxu0 0.0
        %1357 = vmatpush1.msra.mxu0 0.0
        %1358 = vmatprep.subr.mxu0 0.0
        %1359 = vmatpush1.msra.mxu0 0.0
        %1360 = vmatprep.subr.mxu0 0.0
        %1361 = vmatpush1.msra.mxu0 0.0
        %1362 = vmatprep.subr.mxu0 0.0
        %1363 = vmatpush1.msra.mxu0 0.0
        %1364 = vmatprep.subr.mxu0 0.0
        %1365 = vmatpush1.msra.mxu0 0.0
        %1366 = vmatprep.subr.mxu0 0.0
        %1367 = vmatpush1.msra.mxu0 0.0
        %1368 = vmatprep.subr.mxu0 0.0
        %1369 = vmatpush1.msra.mxu0 0.0
        %1370 = vmatprep.subr.mxu0 0.0
        %1371 = vmatpush1.msra.mxu0 0.0
        %1372 = vmatprep.subr.mxu0 0.0
        %1373 = vmatpush1.msra.mxu0 0.0
        %1374 = vmatprep.subr.mxu0 0.0
        %1375 = vmatpush1.msra.mxu0 0.0
        %1376 = vmatprep.subr.mxu0 0.0
        %1377 = vmatpush1.msra.mxu0 0.0
        %1378 = vmatprep.subr.mxu0 0.0
        %1379 = vmatpush1.msra.mxu0 0.0
        %1380 = vmatprep.subr.mxu0 0.0
        %1381 = vmatpush1.msra.mxu0 0.0
        %1382 = vmatprep.subr.mxu0 0.0
        %1383 = vmatpush1.msra.mxu0 0.0
        %1384 = vmatprep.subr.mxu0 0.0
        %1385 = vmatpush1.msra.mxu0 0.0
        %1386 = vmatprep.subr.mxu0 0.0
        %1387 = vmatpush1.msra.mxu0 0.0
        %1388 = vmatprep.subr.mxu0 0.0
        %1389 = vmatpush1.msra.mxu0 0.0
        %1390 = vmatprep.mubr.f32.mxu0 0.0
        %v1391 = vand.u32 %v1159, 4294901760
        %1392 = vmatmul.mubr.f32.gmra.mrb[0].mxu0 %v1391
        %v1393 = vpop.f32.mrb[0].mxu0
        %v1394 = vadd.f32 %v1250, %v1393
        %v1395 = vpop.f32.mrb[0].mxu0
        %v1396 = vadd.f32 %v1252, %v1395
        %1397 = vmatprep.mubr.f32.mxu0 0.0
        %v1398 = vand.u32 %v1162, 4294901760
        %1399 = vmatmul.mubr.f32.gmra.mrb[0].mxu0 %v1398
        %v1400 = vpop.f32.mrb[0].mxu0
        %v1401 = vadd.f32 %v1261, %v1400
        %v1402 = vpop.f32.mrb[0].mxu0
        %v1403 = vadd.f32 %v1263, %v1402
        %1404 = vmatprep.mubr.f32.mxu0 0.0
        %v1405 = vand.u32 %v1165, 4294901760
        %1406 = vmatmul.mubr.f32.gmra.mrb[0].mxu0 %v1405
        %v1407 = vpop.f32.mrb[0].mxu0
        %v1408 = vadd.f32 %v1272, %v1407
        %v1409 = vpop.f32.mrb[0].mxu0
        %v1410 = vadd.f32 %v1274, %v1409
        %1411 = vmatprep.mubr.f32.mxu0 0.0
        %v1412 = vand.u32 %v1168, 4294901760
        %1413 = vmatmul.mubr.f32.gmra.mrb[0].mxu0 %v1412
        %v1414 = vpop.f32.mrb[0].mxu0
        %v1415 = vadd.f32 %v1283, %v1414
        %v1416 = vpop.f32.mrb[0].mxu0
        %1417 = vdwg.mxu0
        %v1418 = vand.u32 %v730, 4294901760
        %v1419 = vsub.f32 %v730, %v1418
        %1420 = vmatprep.subr.mxu0 %v1419
        %v1421 = vand.u32 %v729, 4294901760
        %v1422 = vsub.f32 %v729, %v1421
        %1423 = vmatpush1.msra.mxu0 %v1422
        %v1424 = vand.u32 %v732, 4294901760
        %v1425 = vsub.f32 %v732, %v1424
        %1426 = vmatprep.subr.mxu0 %v1425
        %v1427 = vand.u32 %v731, 4294901760
        %v1428 = vsub.f32 %v731, %v1427
        %1429 = vmatpush1.msra.mxu0 %v1428
        %v1430 = vand.u32 %v1150, 4294901760
        %v1431 = vsub.f32 %v1150, %v1430
        %1432 = vmatprep.subr.mxu0 %v1431
        %v1433 = vand.u32 %v1149, 4294901760
        %v1434 = vsub.f32 %v1149, %v1433
        %1435 = vmatpush1.msra.mxu0 %v1434
        %v1436 = vand.u32 %v1152, 4294901760
        %v1437 = vsub.f32 %v1152, %v1436
        %1438 = vmatprep.subr.mxu0 %v1437
        %v1439 = vand.u32 %v1151, 4294901760
        %v1440 = vsub.f32 %v1151, %v1439
        %1441 = vmatpush1.msra.mxu0 %v1440
        %1442 = vmatprep.subr.mxu0 0.0
        %1443 = vmatpush1.msra.mxu0 0.0
        %1444 = vmatprep.subr.mxu0 0.0
        %1445 = vmatpush1.msra.mxu0 0.0
        %1446 = vmatprep.subr.mxu0 0.0
        %1447 = vmatpush1.msra.mxu0 0.0
        %1448 = vmatprep.subr.mxu0 0.0
        %1449 = vmatpush1.msra.mxu0 0.0
        %1450 = vmatprep.subr.mxu0 0.0
        %1451 = vmatpush1.msra.mxu0 0.0
        %1452 = vmatprep.subr.mxu0 0.0
        %1453 = vmatpush1.msra.mxu0 0.0
        %1454 = vmatprep.subr.mxu0 0.0
        %1455 = vmatpush1.msra.mxu0 0.0
        %1456 = vmatprep.subr.mxu0 0.0
        %1457 = vmatpush1.msra.mxu0 0.0
        %1458 = vmatprep.subr.mxu0 0.0
        %1459 = vmatpush1.msra.mxu0 0.0
        %1460 = vmatprep.subr.mxu0 0.0
        %1461 = vmatpush1.msra.mxu0 0.0
        %1462 = vmatprep.subr.mxu0 0.0
        %1463 = vmatpush1.msra.mxu0 0.0
        %1464 = vmatprep.subr.mxu0 0.0
        %1465 = vmatpush1.msra.mxu0 0.0
        %1466 = vmatprep.subr.mxu0 0.0
        %1467 = vmatpush1.msra.mxu0 0.0
        %1468 = vmatprep.subr.mxu0 0.0
        %1469 = vmatpush1.msra.mxu0 0.0
        %1470 = vmatprep.subr.mxu0 0.0
        %1471 = vmatpush1.msra.mxu0 0.0
        %1472 = vmatprep.subr.mxu0 0.0
        %1473 = vmatpush1.msra.mxu0 0.0
        %1474 = vmatprep.subr.mxu0 0.0
        %1475 = vmatpush1.msra.mxu0 0.0
        %1476 = vmatprep.subr.mxu0 0.0
        %1477 = vmatpush1.msra.mxu0 0.0
        %1478 = vmatprep.subr.mxu0 0.0
        %1479 = vmatpush1.msra.mxu0 0.0
        %1480 = vmatprep.subr.mxu0 0.0
        %1481 = vmatpush1.msra.mxu0 0.0
        %1482 = vmatprep.subr.mxu0 0.0
        %1483 = vmatpush1.msra.mxu0 0.0
        %1484 = vmatprep.subr.mxu0 0.0
        %1485 = vmatpush1.msra.mxu0 0.0
        %1486 = vmatprep.subr.mxu0 0.0
        %1487 = vmatpush1.msra.mxu0 0.0
        %1488 = vmatprep.subr.mxu0 0.0
        %1489 = vmatpush1.msra.mxu0 0.0
        %1490 = vmatprep.subr.mxu0 0.0
        %1491 = vmatpush1.msra.mxu0 0.0
        %1492 = vmatprep.subr.mxu0 0.0
        %1493 = vmatpush1.msra.mxu0 0.0
        %1494 = vmatprep.subr.mxu0 0.0
        %1495 = vmatpush1.msra.mxu0 0.0
        %1496 = vmatprep.subr.mxu0 0.0
        %1497 = vmatpush1.msra.mxu0 0.0
        %1498 = vmatprep.mubr.f32.mxu0 0.0
        %v1499 = vand.u32 %v1159, 4294901760
        %v1500 = vsub.f32 %v1159, %v1499
        %1501 = vmatmul.mubr.f32.gmra.mrb[0].mxu0 %v1500
        %v1502 = vpop.f32.mrb[0].mxu0
        %v1503 = vadd.f32 %v1394, %v1502
        %v1504 = vpop.f32.mrb[0].mxu0
        %v1505 = vadd.f32 %v1396, %v1504
        %1506 = vmatprep.mubr.f32.mxu0 0.0
        %v1507 = vand.u32 %v1162, 4294901760
        %v1508 = vsub.f32 %v1162, %v1507
        %1509 = vmatmul.mubr.f32.gmra.mrb[0].mxu0 %v1508
        %v1510 = vpop.f32.mrb[0].mxu0
        %v1511 = vadd.f32 %v1401, %v1510
        %v1512 = vpop.f32.mrb[0].mxu0
        %v1513 = vadd.f32 %v1403, %v1512
        %1514 = vmatprep.mubr.f32.mxu0 0.0
        %v1515 = vand.u32 %v1165, 4294901760
        %v1516 = vsub.f32 %v1165, %v1515
        %1517 = vmatmul.mubr.f32.gmra.mrb[0].mxu0 %v1516
        %v1518 = vpop.f32.mrb[0].mxu0
        %v1519 = vadd.f32 %v1408, %v1518
        %v1520 = vpop.f32.mrb[0].mxu0
        %v1521 = vadd.f32 %v1410, %v1520
        %1522 = vmatprep.mubr.f32.mxu0 0.0
        %v1523 = vand.u32 %v1168, 4294901760
        %v1524 = vsub.f32 %v1168, %v1523
        %1525 = vmatmul.mubr.f32.gmra.mrb[0].mxu0 %v1524
        %v1526 = vpop.f32.mrb[0].mxu0
        %v1527 = vadd.f32 %v1415, %v1526
        %v1528 = vpop.f32.mrb[0].mxu0
        %1529 = vdwg.mxu0
        %v1530 = vand.u32 %v730, 4294901760
        %1531 = vmatprep.subr.mxu0 %v1530
        %v1532 = vand.u32 %v729, 4294901760
        %1533 = vmatpush1.msra.mxu0 %v1532
        %v1534 = vand.u32 %v732, 4294901760
        %1535 = vmatprep.subr.mxu0 %v1534
        %v1536 = vand.u32 %v731, 4294901760
        %1537 = vmatpush1.msra.mxu0 %v1536
        %v1538 = vand.u32 %v1150, 4294901760
        %1539 = vmatprep.subr.mxu0 %v1538
        %v1540 = vand.u32 %v1149, 4294901760
        %1541 = vmatpush1.msra.mxu0 %v1540
        %v1542 = vand.u32 %v1152, 4294901760
        %1543 = vmatprep.subr.mxu0 %v1542
        %v1544 = vand.u32 %v1151, 4294901760
        %1545 = vmatpush1.msra.mxu0 %v1544
        %1546 = vmatprep.subr.mxu0 0.0
        %1547 = vmatpush1.msra.mxu0 0.0
        %1548 = vmatprep.subr.mxu0 0.0
        %1549 = vmatpush1.msra.mxu0 0.0
        %1550 = vmatprep.subr.mxu0 0.0
        %1551 = vmatpush1.msra.mxu0 0.0
        %1552 = vmatprep.subr.mxu0 0.0
        %1553 = vmatpush1.msra.mxu0 0.0
        %1554 = vmatprep.subr.mxu0 0.0
        %1555 = vmatpush1.msra.mxu0 0.0
        %1556 = vmatprep.subr.mxu0 0.0
        %1557 = vmatpush1.msra.mxu0 0.0
        %1558 = vmatprep.subr.mxu0 0.0
        %1559 = vmatpush1.msra.mxu0 0.0
        %1560 = vmatprep.subr.mxu0 0.0
        %1561 = vmatpush1.msra.mxu0 0.0
        %1562 = vmatprep.subr.mxu0 0.0
        %1563 = vmatpush1.msra.mxu0 0.0
        %1564 = vmatprep.subr.mxu0 0.0
        %1565 = vmatpush1.msra.mxu0 0.0
        %1566 = vmatprep.subr.mxu0 0.0
        %1567 = vmatpush1.msra.mxu0 0.0
        %1568 = vmatprep.subr.mxu0 0.0
        %1569 = vmatpush1.msra.mxu0 0.0
        %1570 = vmatprep.subr.mxu0 0.0
        %1571 = vmatpush1.msra.mxu0 0.0
        %1572 = vmatprep.subr.mxu0 0.0
        %1573 = vmatpush1.msra.mxu0 0.0
        %1574 = vmatprep.subr.mxu0 0.0
        %1575 = vmatpush1.msra.mxu0 0.0
        %1576 = vmatprep.subr.mxu0 0.0
        %1577 = vmatpush1.msra.mxu0 0.0
        %1578 = vmatprep.subr.mxu0 0.0
        %1579 = vmatpush1.msra.mxu0 0.0
        %1580 = vmatprep.subr.mxu0 0.0
        %1581 = vmatpush1.msra.mxu0 0.0
        %1582 = vmatprep.subr.mxu0 0.0
        %1583 = vmatpush1.msra.mxu0 0.0
        %1584 = vmatprep.subr.mxu0 0.0
        %1585 = vmatpush1.msra.mxu0 0.0
        %1586 = vmatprep.subr.mxu0 0.0
        %1587 = vmatpush1.msra.mxu0 0.0
        %1588 = vmatprep.subr.mxu0 0.0
        %1589 = vmatpush1.msra.mxu0 0.0
        %1590 = vmatprep.subr.mxu0 0.0
        %1591 = vmatpush1.msra.mxu0 0.0
        %1592 = vmatprep.subr.mxu0 0.0
        %1593 = vmatpush1.msra.mxu0 0.0
        %1594 = vmatprep.subr.mxu0 0.0
        %1595 = vmatpush1.msra.mxu0 0.0
        %1596 = vmatprep.subr.mxu0 0.0
        %1597 = vmatpush1.msra.mxu0 0.0
        %1598 = vmatprep.subr.mxu0 0.0
        %1599 = vmatpush1.msra.mxu0 0.0
        %1600 = vmatprep.subr.mxu0 0.0
        %1601 = vmatpush1.msra.mxu0 0.0
        %1602 = vmatprep.mubr.f32.mxu0 0.0
        %v1603 = vand.u32 %v1159, 4294901760
        %v1604 = vsub.f32 %v1159, %v1603
        %v1605 = vand.u32 %v1604, 4294901760
        %1606 = vmatmul.mubr.f32.gmra.mrb[0].mxu0 %v1605
        %v1607 = vpop.f32.mrb[0].mxu0
        %v1608 = vadd.f32 %v1503, %v1607
        %v1609 = vpop.f32.mrb[0].mxu0
        %v1610 = vadd.f32 %v1505, %v1609
        %1611 = vmatprep.mubr.f32.mxu0 0.0
        %v1612 = vand.u32 %v1162, 4294901760
        %v1613 = vsub.f32 %v1162, %v1612
        %v1614 = vand.u32 %v1613, 4294901760
        %1615 = vmatmul.mubr.f32.gmra.mrb[0].mxu0 %v1614
        %v1616 = vpop.f32.mrb[0].mxu0
        %v1617 = vadd.f32 %v1511, %v1616
        %v1618 = vpop.f32.mrb[0].mxu0
        %v1619 = vadd.f32 %v1513, %v1618
        %1620 = vmatprep.mubr.f32.mxu0 0.0
        %v1621 = vand.u32 %v1165, 4294901760
        %v1622 = vsub.f32 %v1165, %v1621
        %v1623 = vand.u32 %v1622, 4294901760
        %1624 = vmatmul.mubr.f32.gmra.mrb[0].mxu0 %v1623
        %v1625 = vpop.f32.mrb[0].mxu0
        %v1626 = vadd.f32 %v1519, %v1625
        %v1627 = vpop.f32.mrb[0].mxu0
        %v1628 = vadd.f32 %v1521, %v1627
        %1629 = vmatprep.mubr.f32.mxu0 0.0
        %v1630 = vand.u32 %v1168, 4294901760
        %v1631 = vsub.f32 %v1168, %v1630
        %v1632 = vand.u32 %v1631, 4294901760
        %1633 = vmatmul.mubr.f32.gmra.mrb[0].mxu0 %v1632
        %v1634 = vpop.f32.mrb[0].mxu0
        %v1635 = vadd.f32 %v1527, %v1634
        %v1636 = vpop.f32.mrb[0].mxu0
        %1637 = vdwg.mxu0
        %v1638 = vand.u32 %v730, 4294901760
        %v1639 = vsub.f32 %v730, %v1638
        %v1640 = vand.u32 %v1639, 4294901760
        %1641 = vmatprep.subr.mxu0 %v1640
        %v1642 = vand.u32 %v729, 4294901760
        %v1643 = vsub.f32 %v729, %v1642
        %v1644 = vand.u32 %v1643, 4294901760
        %1645 = vmatpush1.msra.mxu0 %v1644
        %v1646 = vand.u32 %v732, 4294901760
        %v1647 = vsub.f32 %v732, %v1646
        %v1648 = vand.u32 %v1647, 4294901760
        %1649 = vmatprep.subr.mxu0 %v1648
        %v1650 = vand.u32 %v731, 4294901760
        %v1651 = vsub.f32 %v731, %v1650
        %v1652 = vand.u32 %v1651, 4294901760
        %1653 = vmatpush1.msra.mxu0 %v1652
        %v1654 = vand.u32 %v1150, 4294901760
        %v1655 = vsub.f32 %v1150, %v1654
        %v1656 = vand.u32 %v1655, 4294901760
        %1657 = vmatprep.subr.mxu0 %v1656
        %v1658 = vand.u32 %v1149, 4294901760
        %v1659 = vsub.f32 %v1149, %v1658
        %v1660 = vand.u32 %v1659, 4294901760
        %1661 = vmatpush1.msra.mxu0 %v1660
        %v1662 = vand.u32 %v1152, 4294901760
        %v1663 = vsub.f32 %v1152, %v1662
        %v1664 = vand.u32 %v1663, 4294901760
        %1665 = vmatprep.subr.mxu0 %v1664
        %v1666 = vand.u32 %v1151, 4294901760
        %v1667 = vsub.f32 %v1151, %v1666
        %v1668 = vand.u32 %v1667, 4294901760
        %1669 = vmatpush1.msra.mxu0 %v1668
        %1670 = vmatprep.subr.mxu0 0.0
        %1671 = vmatpush1.msra.mxu0 0.0
        %1672 = vmatprep.subr.mxu0 0.0
        %1673 = vmatpush1.msra.mxu0 0.0
        %1674 = vmatprep.subr.mxu0 0.0
        %1675 = vmatpush1.msra.mxu0 0.0
        %1676 = vmatprep.subr.mxu0 0.0
        %1677 = vmatpush1.msra.mxu0 0.0
        %1678 = vmatprep.subr.mxu0 0.0
        %1679 = vmatpush1.msra.mxu0 0.0
        %1680 = vmatprep.subr.mxu0 0.0
        %1681 = vmatpush1.msra.mxu0 0.0
        %1682 = vmatprep.subr.mxu0 0.0
        %1683 = vmatpush1.msra.mxu0 0.0
        %1684 = vmatprep.subr.mxu0 0.0
        %1685 = vmatpush1.msra.mxu0 0.0
        %1686 = vmatprep.subr.mxu0 0.0
        %1687 = vmatpush1.msra.mxu0 0.0
        %1688 = vmatprep.subr.mxu0 0.0
        %1689 = vmatpush1.msra.mxu0 0.0
        %1690 = vmatprep.subr.mxu0 0.0
        %1691 = vmatpush1.msra.mxu0 0.0
        %1692 = vmatprep.subr.mxu0 0.0
        %1693 = vmatpush1.msra.mxu0 0.0
        %1694 = vmatprep.subr.mxu0 0.0
        %1695 = vmatpush1.msra.mxu0 0.0
        %1696 = vmatprep.subr.mxu0 0.0
        %1697 = vmatpush1.msra.mxu0 0.0
        %1698 = vmatprep.subr.mxu0 0.0
        %1699 = vmatpush1.msra.mxu0 0.0
        %1700 = vmatprep.subr.mxu0 0.0
        %1701 = vmatpush1.msra.mxu0 0.0
        %1702 = vmatprep.subr.mxu0 0.0
        %1703 = vmatpush1.msra.mxu0 0.0
        %1704 = vmatprep.subr.mxu0 0.0
        %1705 = vmatpush1.msra.mxu0 0.0
        %1706 = vmatprep.subr.mxu0 0.0
        %1707 = vmatpush1.msra.mxu0 0.0
        %1708 = vmatprep.subr.mxu0 0.0
        %1709 = vmatpush1.msra.mxu0 0.0
        %1710 = vmatprep.subr.mxu0 0.0
        %1711 = vmatpush1.msra.mxu0 0.0
        %1712 = vmatprep.subr.mxu0 0.0
        %1713 = vmatpush1.msra.mxu0 0.0
        %1714 = vmatprep.subr.mxu0 0.0
        %1715 = vmatpush1.msra.mxu0 0.0
        %1716 = vmatprep.subr.mxu0 0.0
        %1717 = vmatpush1.msra.mxu0 0.0
        %1718 = vmatprep.subr.mxu0 0.0
        %1719 = vmatpush1.msra.mxu0 0.0
        %1720 = vmatprep.subr.mxu0 0.0
        %1721 = vmatpush1.msra.mxu0 0.0
        %1722 = vmatprep.subr.mxu0 0.0
        %1723 = vmatpush1.msra.mxu0 0.0
        %1724 = vmatprep.subr.mxu0 0.0
        %1725 = vmatpush1.msra.mxu0 0.0
        %1726 = vmatprep.mubr.f32.mxu0 0.0
        %v1727 = vand.u32 %v1159, 4294901760
        %1728 = vmatmul.mubr.f32.gmra.mrb[0].mxu0 %v1727
        %v1729 = vpop.f32.mrb[0].mxu0
        %v1730 = vadd.f32 %v1608, %v1729
        %v1731 = vpop.f32.mrb[0].mxu0
        %v1732 = vadd.f32 %v1610, %v1731
        %1733 = vmatprep.mubr.f32.mxu0 0.0
        %v1734 = vand.u32 %v1162, 4294901760
        %1735 = vmatmul.mubr.f32.gmra.mrb[0].mxu0 %v1734
        %v1736 = vpop.f32.mrb[0].mxu0
        %v1737 = vadd.f32 %v1617, %v1736
        %v1738 = vpop.f32.mrb[0].mxu0
        %v1739 = vadd.f32 %v1619, %v1738
        %1740 = vmatprep.mubr.f32.mxu0 0.0
        %v1741 = vand.u32 %v1165, 4294901760
        %1742 = vmatmul.mubr.f32.gmra.mrb[0].mxu0 %v1741
        %v1743 = vpop.f32.mrb[0].mxu0
        %v1744 = vadd.f32 %v1626, %v1743
        %v1745 = vpop.f32.mrb[0].mxu0
        %v1746 = vadd.f32 %v1628, %v1745
        %1747 = vmatprep.mubr.f32.mxu0 0.0
        %v1748 = vand.u32 %v1168, 4294901760
        %1749 = vmatmul.mubr.f32.gmra.mrb[0].mxu0 %v1748
        %v1750 = vpop.f32.mrb[0].mxu0
        %v1751 = vadd.f32 %v1635, %v1750
        %v1752 = vpop.f32.mrb[0].mxu0
        %1753 = vdwg.mxu0
        %v1754 = vand.u32 %v730, 4294901760
        %1755 = vmatprep.subr.mxu0 %v1754
        %v1756 = vand.u32 %v729, 4294901760
        %1757 = vmatpush1.msra.mxu0 %v1756
        %v1758 = vand.u32 %v732, 4294901760
        %1759 = vmatprep.subr.mxu0 %v1758
        %v1760 = vand.u32 %v731, 4294901760
        %1761 = vmatpush1.msra.mxu0 %v1760
        %v1762 = vand.u32 %v1150, 4294901760
        %1763 = vmatprep.subr.mxu0 %v1762
        %v1764 = vand.u32 %v1149, 4294901760
        %1765 = vmatpush1.msra.mxu0 %v1764
        %v1766 = vand.u32 %v1152, 4294901760
        %1767 = vmatprep.subr.mxu0 %v1766
        %v1768 = vand.u32 %v1151, 4294901760
        %1769 = vmatpush1.msra.mxu0 %v1768
        %1770 = vmatprep.subr.mxu0 0.0
        %1771 = vmatpush1.msra.mxu0 0.0
        %1772 = vmatprep.subr.mxu0 0.0
        %1773 = vmatpush1.msra.mxu0 0.0
        %1774 = vmatprep.subr.mxu0 0.0
        %1775 = vmatpush1.msra.mxu0 0.0
        %1776 = vmatprep.subr.mxu0 0.0
        %1777 = vmatpush1.msra.mxu0 0.0
        %1778 = vmatprep.subr.mxu0 0.0
        %1779 = vmatpush1.msra.mxu0 0.0
        %1780 = vmatprep.subr.mxu0 0.0
        %1781 = vmatpush1.msra.mxu0 0.0
        %1782 = vmatprep.subr.mxu0 0.0
        %1783 = vmatpush1.msra.mxu0 0.0
        %1784 = vmatprep.subr.mxu0 0.0
        %1785 = vmatpush1.msra.mxu0 0.0
        %1786 = vmatprep.subr.mxu0 0.0
        %1787 = vmatpush1.msra.mxu0 0.0
        %1788 = vmatprep.subr.mxu0 0.0
        %1789 = vmatpush1.msra.mxu0 0.0
        %1790 = vmatprep.subr.mxu0 0.0
        %1791 = vmatpush1.msra.mxu0 0.0
        %1792 = vmatprep.subr.mxu0 0.0
        %1793 = vmatpush1.msra.mxu0 0.0
        %1794 = vmatprep.subr.mxu0 0.0
        %1795 = vmatpush1.msra.mxu0 0.0
        %1796 = vmatprep.subr.mxu0 0.0
        %1797 = vmatpush1.msra.mxu0 0.0
        %1798 = vmatprep.subr.mxu0 0.0
        %1799 = vmatpush1.msra.mxu0 0.0
        %1800 = vmatprep.subr.mxu0 0.0
        %1801 = vmatpush1.msra.mxu0 0.0
        %1802 = vmatprep.subr.mxu0 0.0
        %1803 = vmatpush1.msra.mxu0 0.0
        %1804 = vmatprep.subr.mxu0 0.0
        %1805 = vmatpush1.msra.mxu0 0.0
        %1806 = vmatprep.subr.mxu0 0.0
        %1807 = vmatpush1.msra.mxu0 0.0
        %1808 = vmatprep.subr.mxu0 0.0
        %1809 = vmatpush1.msra.mxu0 0.0
        %1810 = vmatprep.subr.mxu0 0.0
        %1811 = vmatpush1.msra.mxu0 0.0
        %1812 = vmatprep.subr.mxu0 0.0
        %1813 = vmatpush1.msra.mxu0 0.0
        %1814 = vmatprep.subr.mxu0 0.0
        %1815 = vmatpush1.msra.mxu0 0.0
        %1816 = vmatprep.subr.mxu0 0.0
        %1817 = vmatpush1.msra.mxu0 0.0
        %1818 = vmatprep.subr.mxu0 0.0
        %1819 = vmatpush1.msra.mxu0 0.0
        %1820 = vmatprep.subr.mxu0 0.0
        %1821 = vmatpush1.msra.mxu0 0.0
        %1822 = vmatprep.subr.mxu0 0.0
        %1823 = vmatpush1.msra.mxu0 0.0
        %1824 = vmatprep.subr.mxu0 0.0
        %1825 = vmatpush1.msra.mxu0 0.0
        %1826 = vmatprep.mubr.f32.mxu0 0.0
        %v1827 = vand.u32 %v1159, 4294901760
        %1828 = vmatmul.mubr.f32.gmra.mrb[0].mxu0 %v1827
        %v1829 = vpop.f32.mrb[0].mxu0
        %v1830 = vadd.f32 %v1730, %v1829
        %v1831 = vpop.f32.mrb[0].mxu0
        %v1832 = vadd.f32 %v1732, %v1831
        %1833 = vmatprep.mubr.f32.mxu0 0.0
        %v1834 = vand.u32 %v1162, 4294901760
        %1835 = vmatmul.mubr.f32.gmra.mrb[0].mxu0 %v1834
        %v1836 = vpop.f32.mrb[0].mxu0
        %v1837 = vadd.f32 %v1737, %v1836
        %v1838 = vpop.f32.mrb[0].mxu0
        %v1839 = vadd.f32 %v1739, %v1838
        %1840 = vmatprep.mubr.f32.mxu0 0.0
        %v1841 = vand.u32 %v1165, 4294901760
        %1842 = vmatmul.mubr.f32.gmra.mrb[0].mxu0 %v1841
        %v1843 = vpop.f32.mrb[0].mxu0
        %v1844 = vadd.f32 %v1744, %v1843
        %v1845 = vpop.f32.mrb[0].mxu0
        %v1846 = vadd.f32 %v1746, %v1845
        %1847 = vmatprep.mubr.f32.mxu0 0.0
        %v1848 = vand.u32 %v1168, 4294901760
        %1849 = vmatmul.mubr.f32.gmra.mrb[0].mxu0 %v1848
        %v1850 = vpop.f32.mrb[0].mxu0
        %v1851 = vadd.f32 %v1751, %v1850
        %v1852 = vpop.f32.mrb[0].mxu0
        %1853 = vdwg.mxu0
        %1856 = vrot.lane.b32.xlu0 %v1837, 1
        %v1857 = vpop.permute.xlu0 %1856
        %1858 = vrot.lane.b32.xlu0 %v1839, 1
        %v1859 = vpop.permute.xlu0 %1858
        %vm1860 = vcmask 7168
        %v1861 = vsel %vm1860, %v1857, %v1859
        %v1864 = vadd.f32 %v1830, %v1857
        %v1865 = vadd.f32 %v1832, %v1861
        %1868 = vrot.lane.b32.xlu0 %v1844, 2
        %v1869 = vpop.permute.xlu0 %1868
        %1870 = vrot.lane.b32.xlu0 %v1846, 2
        %v1871 = vpop.permute.xlu0 %1870
        %vm1872 = vcmask 15360
        %v1873 = vsel %vm1872, %v1869, %v1871
        %v1876 = vadd.f32 %v1864, %v1869
        %v1877 = vadd.f32 %v1865, %v1873
        %1879 = vrot.lane.b32.xlu0 %v1851, 3
        %v1880 = vpop.permute.xlu0 %1879
        %v1882 = vadd.f32 %v1876, %v1880
        %v1883 = vadd.f32 %v1877, %v1880
        %v1884 = vld [vmem:[%s308] sm:$0xff]
        %1886 = vrot.lane.b32.xlu0 %v1884, 3
        %v1887 = vpop.permute.xlu0 %1886
        %v1889 = vmul.f32 %v1882, %v1887
        %v1890 = vmul.f32 %v1883, %v1887
        %1893 = vrot.lane.b32.xlu0 %v1889, 125
        %v1894 = vpop.permute.xlu0 %1893
        %1895 = vrot.lane.b32.xlu0 %v1890, 125
        %v1896 = vpop.permute.xlu0 %1895
        %vm1897 = vcmask 1022976
        %v1898 = vsel %vm1897, %v1894, %v1896
        %1900 = vst [vmem:[%s304] sm:$0xff] %v1898
        %s1901 = sand.u32 %s149, 1
        %s1902 = scalar_lea.sflag [#allocation4], %s1901
        %s1903 = sand.u32 %s149, 1
        %s1904 = smul.addr %s1903, 8
        %s1905 = scalar_lea.vmem [#allocation8], %s1904
        // Predicated region
        $region49: #{tpu_custom_call.1} parent=35 // pred_check
          %p1906 = pneg %p159
        $region50: #{tpu_custom_call.1} parent=35 // pred_check_branch
          %1908 = sbr.rel (%p1906) target = $region52
        $region51: #{tpu_custom_call.1} parent=35 // pred_region
          %s1910 = ssub.s32 128, 128
          %1911 = vsyncadd %s1902, %s1910
          %s1912 = sadd.s32 %s29, %s28
          %s1913 = smul.addr %s1912, 128
          %s1914 = scalar_lea.hbm %s4, %s1913
          %s1916 = sshll.u32 %s1905, 4
          %s1917 = int_to_ptr.vmem [resolvable:$true] %s1916
          %1919 = dma.vmem_to_hbm [thread:$0]  %s1917, 128, %s1914, %s1902
        $region52: #{tpu_custom_call.1} parent=35 // pred_fallthru
          _
      $region36: #{tpu_custom_call.1} parent=5 // pred_fallthru
        _
      %p1920 = scmp.le.s32.totalorder 2, %s19
      // Predicated region
      $region53: #{tpu_custom_call.1} parent=5 // pred_check
        %p1921 = pneg %p1920
      $region54: #{tpu_custom_call.1} parent=5 // pred_check_branch
        %1923 = sbr.rel (%p1921) target = $region56
      $region55: #{tpu_custom_call.1} parent=5 // pred_region
        %s1924 = ssub.s32 %s19, 2
        // Predicated region
        $region57: #{tpu_custom_call.1} parent=55 // pred_check
          %p1925 = pneg %p165
        $region58: #{tpu_custom_call.1} parent=55 // pred_check_branch
          %1927 = sbr.rel (%p1925) target = $region60
        $region59: #{tpu_custom_call.1} parent=55 // pred_region
          %s1928 = sand.u32 %s150, 1
          %s1929 = scalar_lea.sflag [#allocation4], %s1928
          %s1930 = sand.u32 %s150, 1
          %s1931 = smul.addr %s1930, 8
          %s1932 = scalar_lea.vmem [#allocation8], %s1931
          %1933 = dma.done %s1929, 128
        $region60: #{tpu_custom_call.1} parent=55 // pred_fallthru
          _
      $region56: #{tpu_custom_call.1} parent=5 // pred_fallthru
        _
    $region6: #{tpu_custom_call.1} parent=1 // loop_footer
      %s23 = sadd.s32 1, %s19
    $region7: #{tpu_custom_call.1} parent=1 // loop_footer_branch
      %18 = sbr.rel target = $region3
    $region8: #{tpu_custom_call.1} parent=1 // loop_exit
      _
    %1934 = vsyncpa [#allocation3], 1
    %s1935 = scalar_lea.sflag [#allocation3], 1
    %1936 = vsyncpa %s1935, 1
    %1937 = vsyncpa [#allocation6], 1
    %s1938 = scalar_lea.sflag [#allocation6], 1
    %1939 = vsyncpa %s1938, 1
    %1940 = vsyncpa [#allocation4], 1
    %s1941 = scalar_lea.sflag [#allocation4], 1
    %1942 = vsyncpa %s1941, 1

</llo_original>
